<compile_context>
chip_gen: v6e
topology: v6e:2x2x1
jax: 0.10.0
libtpu: 0.0.40
codegen_flags: <defaults>
</compile_context>

<pallas_src>
import jax
import jax.numpy as jnp
from jax.experimental import pallas as pl
from jax.experimental.pallas import tpu as pltpu

N_HIDDEN = 8
HIDDEN_DIM = 10
LANE = 128            # lane-dense padded output width
ROWS = 16             # 10 weight rows + 1 bias row, padded to sublane multiple
B_INIT = -0.2


def bn_net_kernel(x_ref, w_ref, out_ref):
    """x_ref: (B, 1) f32; w_ref: (N_HIDDEN+1, ROWS, LANE) f32 packed weights.

    out_ref: (2*N_HIDDEN + 1, B, LANE) f32:
      out[0:8]   -> pre-activations of fc0..fc7 (columns 0..9 valid)
      out[8:16]  -> tanh activations of fc0..fc7 (columns 0..9 valid)
      out[16]    -> predict head output (column 0 valid)
    """
    x = x_ref[...]                                   # (B, 1)

    # ---- layer 0: Linear(1, 10) -- a single broadcast FMA on the VPU ----
    w0 = w_ref[0]                                    # (ROWS, LANE)
    h = w0[HIDDEN_DIM:HIDDEN_DIM + 1, :] + x * w0[0:1, :]   # (B, LANE)
    out_ref[0] = h
    h = jnp.tanh(h)
    out_ref[N_HIDDEN] = h

    # ---- layers 1..7: Linear(10, 10) as 10 VPU broadcast-FMAs each ----
    for layer in range(1, N_HIDDEN):
        wl = w_ref[layer]                            # (ROWS, LANE)
        acc = jnp.broadcast_to(wl[HIDDEN_DIM:HIDDEN_DIM + 1, :], h.shape)
        for k in range(HIDDEN_DIM):
            acc = acc + h[:, k:k + 1] * wl[k:k + 1, :]
        out_ref[layer] = acc
        h = jnp.tanh(acc)
        out_ref[N_HIDDEN + layer] = h

    # ---- predict head: Linear(10, 1); result lives in lane 0 ----
    wp = w_ref[N_HIDDEN]
    acc = jnp.broadcast_to(wp[HIDDEN_DIM:HIDDEN_DIM + 1, :], h.shape)
    for k in range(HIDDEN_DIM):
        acc = acc + h[:, k:k + 1] * wp[k:k + 1, :]
    out_ref[2 * N_HIDDEN] = acc


def init_params(key):
    """Matches _set_init: weight ~ N(0, 0.1), bias = -0.2.

    Weights are stored pre-transposed as (in, out) so the math is x @ W.
    """
    ks = jax.random.split(key, N_HIDDEN + 1)
    w0 = 0.1 * jax.random.normal(ks[0], (1, HIDDEN_DIM), jnp.float32)
    b0 = jnp.full((HIDDEN_DIM,), B_INIT, jnp.float32)
    wr = jnp.stack([0.1 * jax.random.normal(ks[i], (HIDDEN_DIM, HIDDEN_DIM),
                                            jnp.float32)
                    for i in range(1, N_HIDDEN)])            # (7, 10, 10)
    br = jnp.full((N_HIDDEN - 1, HIDDEN_DIM), B_INIT, jnp.float32)
    wp = 0.1 * jax.random.normal(ks[N_HIDDEN], (HIDDEN_DIM, 1), jnp.float32)
    bp = jnp.full((1,), B_INIT, jnp.float32)
    return w0, b0, wr, br, wp, bp


def pack_params(params):
    """Pack every weight and bias into one (9, 16, 128) f32 array."""
    w0, b0, wr, br, wp, bp = params
    packed = jnp.zeros((N_HIDDEN + 1, ROWS, LANE), jnp.float32)
    # layer 0 (in_dim = 1): only weight row 0 is used
    packed = packed.at[0, 0, :HIDDEN_DIM].set(w0[0])
    packed = packed.at[0, HIDDEN_DIM, :HIDDEN_DIM].set(b0)
    # layers 1..7
    packed = packed.at[1:N_HIDDEN, :HIDDEN_DIM, :HIDDEN_DIM].set(wr)
    packed = packed.at[1:N_HIDDEN, HIDDEN_DIM, :HIDDEN_DIM].set(br)
    # predict head (out_dim = 1): lane 0 only
    packed = packed.at[N_HIDDEN, :HIDDEN_DIM, 0].set(wp[:, 0])
    packed = packed.at[N_HIDDEN, HIDDEN_DIM, 0].set(bp[0])
    return packed


def bn_net_forward(x, packed):
    """Returns (pred (B,1), act (8,B,10), pre (8,B,10)) as stacked arrays."""
    B = x.shape[0]
    vmem = pl.BlockSpec(memory_space=pltpu.MemorySpace.VMEM)
    out = pl.pallas_call(
        bn_net_kernel,
        out_shape=jax.ShapeDtypeStruct((2 * N_HIDDEN + 1, B, LANE),
                                       jnp.float32),
        in_specs=[vmem, vmem],
        out_specs=vmem,
    )(x, packed)
    pred = out[2 * N_HIDDEN, :, :1]
    pre = out[:N_HIDDEN, :, :HIDDEN_DIM]
    act = out[N_HIDDEN:2 * N_HIDDEN, :, :HIDDEN_DIM]
    return pred, act, pre


def to_pytorch_lists(x, pred, act, pre):
    """Reproduce BN_net.forward's (pred, layer_input, pre_activation) lists."""
    layer_input = [x] + [act[i] for i in range(N_HIDDEN)]
    pre_activation = [x] + [pre[i] for i in range(N_HIDDEN)]
    return pred, layer_input, pre_activation


def reference_forward(x, params):
    """Plain-JAX reference (BN_net with bn=False)."""
    w0, b0, wr, br, wp, bp = params
    pre_activation = [x]
    layer_input = [x]
    h = x @ w0 + b0
    pre_activation.append(h)
    h = jnp.tanh(h)
    layer_input.append(h)
    for i in range(N_HIDDEN - 1):
        h = h @ wr[i] + br[i]
        pre_activation.append(h)
        h = jnp.tanh(h)
        layer_input.append(h)
    pred = h @ wp + bp
    return pred, layer_input, pre_activation


if __name__ == "__main__":
    key = jax.random.PRNGKey(0)
    k_param, k_x = jax.random.split(key)
    params = init_params(k_param)
    packed = pack_params(params)

    batch = 8
    x = jax.random.normal(k_x, (batch, 1), jnp.float32)

    pred, act, pre = bn_net_forward(x, packed)
    jax.block_until_ready(pred)
    jax.block_until_ready(act)
    jax.block_until_ready(pre)

    # ---- sanity check against the plain-JAX reference ----
    pred_r, li_r, pa_r = reference_forward(x, params)
    assert jnp.allclose(pred, pred_r, atol=1e-5), "pred mismatch"
    assert jnp.allclose(act, jnp.stack(li_r[1:]), atol=1e-5), "act mismatch"
    assert jnp.allclose(pre, jnp.stack(pa_r[1:]), atol=1e-5), "pre mismatch"

    # list-form interface matches the PyTorch module's return signature
    _, layer_input, pre_activation = to_pytorch_lists(x, pred, act, pre)
    for a, b in zip(layer_input, li_r):
        assert jnp.allclose(a, b, atol=1e-5)
    for a, b in zip(pre_activation, pa_r):
        assert jnp.allclose(a, b, atol=1e-5)

    print("KERNEL_OK")
</pallas_src>

<mosaic_0001>
module attributes {stable_mosaic.version = 11 : i64} {
  func.func @bn_net_kernel(%arg0: memref<8x1xf32, #tpu.memory_space<vmem>>, %arg1: memref<9x16x128xf32, #tpu.memory_space<vmem>>, %arg2: memref<17x8x128xf32, #tpu.memory_space<vmem>>) attributes {dimension_semantics = [], scalar_prefetch = 0 : i64, scratch_operands = 0 : i64, tpu.core_type = #tpu.core_type<tc>} {
    %c0 = arith.constant 0 : index
    %c0_0 = arith.constant 0 : index
    %0 = vector.load %arg0[%c0, %c0_0] : memref<8x1xf32, #tpu.memory_space<vmem>>, vector<8x1xf32>
    %c0_1 = arith.constant 0 : index
    %c0_2 = arith.constant 0 : index
    %c0_3 = arith.constant 0 : index
    %1 = vector.load %arg1[%c0_1, %c0_2, %c0_3] : memref<9x16x128xf32, #tpu.memory_space<vmem>>, vector<1x16x128xf32>
    %2 = vector.shape_cast %1 : vector<1x16x128xf32> to vector<16x128xf32>
    %3 = vector.extract_strided_slice %2 {offsets = [10, 0], sizes = [1, 128], strides = [1, 1]} : vector<16x128xf32> to vector<1x128xf32>
    %4 = vector.extract_strided_slice %2 {offsets = [0, 0], sizes = [1, 128], strides = [1, 1]} : vector<16x128xf32> to vector<1x128xf32>
    %5 = vector.broadcast %0 : vector<8x1xf32> to vector<8x128xf32>
    %6 = vector.broadcast %4 : vector<1x128xf32> to vector<8x128xf32>
    %7 = arith.mulf %5, %6 : vector<8x128xf32>
    %8 = vector.broadcast %3 : vector<1x128xf32> to vector<8x128xf32>
    %9 = arith.addf %8, %7 : vector<8x128xf32>
    %c0_4 = arith.constant 0 : index
    %c0_5 = arith.constant 0 : index
    %c0_6 = arith.constant 0 : index
    %10 = vector.load %arg2[%c0_4, %c0_5, %c0_6] : memref<17x8x128xf32, #tpu.memory_space<vmem>>, vector<1x8x128xf32>
    %11 = vector.shape_cast %10 : vector<1x8x128xf32> to vector<8x128xf32>
    %12 = vector.shape_cast %9 : vector<8x128xf32> to vector<1x8x128xf32>
    tpu.vector_store %arg2[%c0_4, %c0_5, %c0_6], %12 {strides = array<i32>} : memref<17x8x128xf32, #tpu.memory_space<vmem>>, vector<1x8x128xf32>,
    %13 = math.tanh %9 : vector<8x128xf32>
    %c8 = arith.constant 8 : index
    %c0_7 = arith.constant 0 : index
    %c0_8 = arith.constant 0 : index
    %14 = vector.load %arg2[%c8, %c0_7, %c0_8] : memref<17x8x128xf32, #tpu.memory_space<vmem>>, vector<1x8x128xf32>
    %15 = vector.shape_cast %14 : vector<1x8x128xf32> to vector<8x128xf32>
    %16 = vector.shape_cast %13 : vector<8x128xf32> to vector<1x8x128xf32>
    tpu.vector_store %arg2[%c8, %c0_7, %c0_8], %16 {strides = array<i32>} : memref<17x8x128xf32, #tpu.memory_space<vmem>>, vector<1x8x128xf32>,
    %c1 = arith.constant 1 : index
    %c0_9 = arith.constant 0 : index
    %c0_10 = arith.constant 0 : index
    %17 = vector.load %arg1[%c1, %c0_9, %c0_10] : memref<9x16x128xf32, #tpu.memory_space<vmem>>, vector<1x16x128xf32>
    %18 = vector.shape_cast %17 : vector<1x16x128xf32> to vector<16x128xf32>
    %19 = vector.extract_strided_slice %18 {offsets = [10, 0], sizes = [1, 128], strides = [1, 1]} : vector<16x128xf32> to vector<1x128xf32>
    %20 = vector.shape_cast %19 : vector<1x128xf32> to vector<1x128xf32>
    %21 = vector.broadcast %20 : vector<1x128xf32> to vector<8x128xf32>
    %22 = vector.extract_strided_slice %13 {offsets = [0, 0], sizes = [8, 1], strides = [1, 1]} : vector<8x128xf32> to vector<8x1xf32>
    %23 = vector.extract_strided_slice %18 {offsets = [0, 0], sizes = [1, 128], strides = [1, 1]} : vector<16x128xf32> to vector<1x128xf32>
    %24 = vector.broadcast %22 : vector<8x1xf32> to vector<8x128xf32>
    %25 = vector.broadcast %23 : vector<1x128xf32> to vector<8x128xf32>
    %26 = arith.mulf %24, %25 : vector<8x128xf32>
    %27 = arith.addf %21, %26 : vector<8x128xf32>
    %28 = vector.extract_strided_slice %13 {offsets = [0, 1], sizes = [8, 1], strides = [1, 1]} : vector<8x128xf32> to vector<8x1xf32>
    %29 = vector.extract_strided_slice %18 {offsets = [1, 0], sizes = [1, 128], strides = [1, 1]} : vector<16x128xf32> to vector<1x128xf32>
    %30 = vector.broadcast %28 : vector<8x1xf32> to vector<8x128xf32>
    %31 = vector.broadcast %29 : vector<1x128xf32> to vector<8x128xf32>
    %32 = arith.mulf %30, %31 : vector<8x128xf32>
    %33 = arith.addf %27, %32 : vector<8x128xf32>
    %34 = vector.extract_strided_slice %13 {offsets = [0, 2], sizes = [8, 1], strides = [1, 1]} : vector<8x128xf32> to vector<8x1xf32>
    %35 = vector.extract_strided_slice %18 {offsets = [2, 0], sizes = [1, 128], strides = [1, 1]} : vector<16x128xf32> to vector<1x128xf32>
    %36 = vector.broadcast %34 : vector<8x1xf32> to vector<8x128xf32>
    %37 = vector.broadcast %35 : vector<1x128xf32> to vector<8x128xf32>
    %38 = arith.mulf %36, %37 : vector<8x128xf32>
    %39 = arith.addf %33, %38 : vector<8x128xf32>
    %40 = vector.extract_strided_slice %13 {offsets = [0, 3], sizes = [8, 1], strides = [1, 1]} : vector<8x128xf32> to vector<8x1xf32>
    %41 = vector.extract_strided_slice %18 {offsets = [3, 0], sizes = [1, 128], strides = [1, 1]} : vector<16x128xf32> to vector<1x128xf32>
    %42 = vector.broadcast %40 : vector<8x1xf32> to vector<8x128xf32>
    %43 = vector.broadcast %41 : vector<1x128xf32> to vector<8x128xf32>
    %44 = arith.mulf %42, %43 : vector<8x128xf32>
    %45 = arith.addf %39, %44 : vector<8x128xf32>
    %46 = vector.extract_strided_slice %13 {offsets = [0, 4], sizes = [8, 1], strides = [1, 1]} : vector<8x128xf32> to vector<8x1xf32>
    %47 = vector.extract_strided_slice %18 {offsets = [4, 0], sizes = [1, 128], strides = [1, 1]} : vector<16x128xf32> to vector<1x128xf32>
    %48 = vector.broadcast %46 : vector<8x1xf32> to vector<8x128xf32>
    %49 = vector.broadcast %47 : vector<1x128xf32> to vector<8x128xf32>
    %50 = arith.mulf %48, %49 : vector<8x128xf32>
    %51 = arith.addf %45, %50 : vector<8x128xf32>
    %52 = vector.extract_strided_slice %13 {offsets = [0, 5], sizes = [8, 1], strides = [1, 1]} : vector<8x128xf32> to vector<8x1xf32>
    %53 = vector.extract_strided_slice %18 {offsets = [5, 0], sizes = [1, 128], strides = [1, 1]} : vector<16x128xf32> to vector<1x128xf32>
    %54 = vector.broadcast %52 : vector<8x1xf32> to vector<8x128xf32>
    %55 = vector.broadcast %53 : vector<1x128xf32> to vector<8x128xf32>
    %56 = arith.mulf %54, %55 : vector<8x128xf32>
    %57 = arith.addf %51, %56 : vector<8x128xf32>
    %58 = vector.extract_strided_slice %13 {offsets = [0, 6], sizes = [8, 1], strides = [1, 1]} : vector<8x128xf32> to vector<8x1xf32>
    %59 = vector.extract_strided_slice %18 {offsets = [6, 0], sizes = [1, 128], strides = [1, 1]} : vector<16x128xf32> to vector<1x128xf32>
    %60 = vector.broadcast %58 : vector<8x1xf32> to vector<8x128xf32>
    %61 = vector.broadcast %59 : vector<1x128xf32> to vector<8x128xf32>
    %62 = arith.mulf %60, %61 : vector<8x128xf32>
    %63 = arith.addf %57, %62 : vector<8x128xf32>
    %64 = vector.extract_strided_slice %13 {offsets = [0, 7], sizes = [8, 1], strides = [1, 1]} : vector<8x128xf32> to vector<8x1xf32>
    %65 = vector.extract_strided_slice %18 {offsets = [7, 0], sizes = [1, 128], strides = [1, 1]} : vector<16x128xf32> to vector<1x128xf32>
    %66 = vector.broadcast %64 : vector<8x1xf32> to vector<8x128xf32>
    %67 = vector.broadcast %65 : vector<1x128xf32> to vector<8x128xf32>
    %68 = arith.mulf %66, %67 : vector<8x128xf32>
    %69 = arith.addf %63, %68 : vector<8x128xf32>
    %70 = vector.extract_strided_slice %13 {offsets = [0, 8], sizes = [8, 1], strides = [1, 1]} : vector<8x128xf32> to vector<8x1xf32>
    %71 = vector.extract_strided_slice %18 {offsets = [8, 0], sizes = [1, 128], strides = [1, 1]} : vector<16x128xf32> to vector<1x128xf32>
    %72 = vector.broadcast %70 : vector<8x1xf32> to vector<8x128xf32>
    %73 = vector.broadcast %71 : vector<1x128xf32> to vector<8x128xf32>
    %74 = arith.mulf %72, %73 : vector<8x128xf32>
    %75 = arith.addf %69, %74 : vector<8x128xf32>
    %76 = vector.extract_strided_slice %13 {offsets = [0, 9], sizes = [8, 1], strides = [1, 1]} : vector<8x128xf32> to vector<8x1xf32>
    %77 = vector.extract_strided_slice %18 {offsets = [9, 0], sizes = [1, 128], strides = [1, 1]} : vector<16x128xf32> to vector<1x128xf32>
    %78 = vector.broadcast %76 : vector<8x1xf32> to vector<8x128xf32>
    %79 = vector.broadcast %77 : vector<1x128xf32> to vector<8x128xf32>
    %80 = arith.mulf %78, %79 : vector<8x128xf32>
    %81 = arith.addf %75, %80 : vector<8x128xf32>
    %c1_11 = arith.constant 1 : index
    %c0_12 = arith.constant 0 : index
    %c0_13 = arith.constant 0 : index
    %82 = vector.load %arg2[%c1_11, %c0_12, %c0_13] : memref<17x8x128xf32, #tpu.memory_space<vmem>>, vector<1x8x128xf32>
    %83 = vector.shape_cast %82 : vector<1x8x128xf32> to vector<8x128xf32>
    %84 = vector.shape_cast %81 : vector<8x128xf32> to vector<1x8x128xf32>
    tpu.vector_store %arg2[%c1_11, %c0_12, %c0_13], %84 {strides = array<i32>} : memref<17x8x128xf32, #tpu.memory_space<vmem>>, vector<1x8x128xf32>,
    %85 = math.tanh %81 : vector<8x128xf32>
    %c9 = arith.constant 9 : index
    %c0_14 = arith.constant 0 : index
    %c0_15 = arith.constant 0 : index
    %86 = vector.load %arg2[%c9, %c0_14, %c0_15] : memref<17x8x128xf32, #tpu.memory_space<vmem>>, vector<1x8x128xf32>
    %87 = vector.shape_cast %86 : vector<1x8x128xf32> to vector<8x128xf32>
    %88 = vector.shape_cast %85 : vector<8x128xf32> to vector<1x8x128xf32>
    tpu.vector_store %arg2[%c9, %c0_14, %c0_15], %88 {strides = array<i32>} : memref<17x8x128xf32, #tpu.memory_space<vmem>>, vector<1x8x128xf32>,
    %c2 = arith.constant 2 : index
    %c0_16 = arith.constant 0 : index
    %c0_17 = arith.constant 0 : index
    %89 = vector.load %arg1[%c2, %c0_16, %c0_17] : memref<9x16x128xf32, #tpu.memory_space<vmem>>, vector<1x16x128xf32>
    %90 = vector.shape_cast %89 : vector<1x16x128xf32> to vector<16x128xf32>
    %91 = vector.extract_strided_slice %90 {offsets = [10, 0], sizes = [1, 128], strides = [1, 1]} : vector<16x128xf32> to vector<1x128xf32>
    %92 = vector.shape_cast %91 : vector<1x128xf32> to vector<1x128xf32>
    %93 = vector.broadcast %92 : vector<1x128xf32> to vector<8x128xf32>
    %94 = vector.extract_strided_slice %85 {offsets = [0, 0], sizes = [8, 1], strides = [1, 1]} : vector<8x128xf32> to vector<8x1xf32>
    %95 = vector.extract_strided_slice %90 {offsets = [0, 0], sizes = [1, 128], strides = [1, 1]} : vector<16x128xf32> to vector<1x128xf32>
    %96 = vector.broadcast %94 : vector<8x1xf32> to vector<8x128xf32>
    %97 = vector.broadcast %95 : vector<1x128xf32> to vector<8x128xf32>
    %98 = arith.mulf %96, %97 : vector<8x128xf32>
    %99 = arith.addf %93, %98 : vector<8x128xf32>
    %100 = vector.extract_strided_slice %85 {offsets = [0, 1], sizes = [8, 1], strides = [1, 1]} : vector<8x128xf32> to vector<8x1xf32>
    %101 = vector.extract_strided_slice %90 {offsets = [1, 0], sizes = [1, 128], strides = [1, 1]} : vector<16x128xf32> to vector<1x128xf32>
    %102 = vector.broadcast %100 : vector<8x1xf32> to vector<8x128xf32>
    %103 = vector.broadcast %101 : vector<1x128xf32> to vector<8x128xf32>
    %104 = arith.mulf %102, %103 : vector<8x128xf32>
    %105 = arith.addf %99, %104 : vector<8x128xf32>
    %106 = vector.extract_strided_slice %85 {offsets = [0, 2], sizes = [8, 1], strides = [1, 1]} : vector<8x128xf32> to vector<8x1xf32>
    %107 = vector.extract_strided_slice %90 {offsets = [2, 0], sizes = [1, 128], strides = [1, 1]} : vector<16x128xf32> to vector<1x128xf32>
    %108 = vector.broadcast %106 : vector<8x1xf32> to vector<8x128xf32>
    %109 = vector.broadcast %107 : vector<1x128xf32> to vector<8x128xf32>
    %110 = arith.mulf %108, %109 : vector<8x128xf32>
    %111 = arith.addf %105, %110 : vector<8x128xf32>
    %112 = vector.extract_strided_slice %85 {offsets = [0, 3], sizes = [8, 1], strides = [1, 1]} : vector<8x128xf32> to vector<8x1xf32>
    %113 = vector.extract_strided_slice %90 {offsets = [3, 0], sizes = [1, 128], strides = [1, 1]} : vector<16x128xf32> to vector<1x128xf32>
    %114 = vector.broadcast %112 : vector<8x1xf32> to vector<8x128xf32>
    %115 = vector.broadcast %113 : vector<1x128xf32> to vector<8x128xf32>
    %116 = arith.mulf %114, %115 : vector<8x128xf32>
    %117 = arith.addf %111, %116 : vector<8x128xf32>
    %118 = vector.extract_strided_slice %85 {offsets = [0, 4], sizes = [8, 1], strides = [1, 1]} : vector<8x128xf32> to vector<8x1xf32>
    %119 = vector.extract_strided_slice %90 {offsets = [4, 0], sizes = [1, 128], strides = [1, 1]} : vector<16x128xf32> to vector<1x128xf32>
    %120 = vector.broadcast %118 : vector<8x1xf32> to vector<8x128xf32>
    %121 = vector.broadcast %119 : vector<1x128xf32> to vector<8x128xf32>
    %122 = arith.mulf %120, %121 : vector<8x128xf32>
    %123 = arith.addf %117, %122 : vector<8x128xf32>
    %124 = vector.extract_strided_slice %85 {offsets = [0, 5], sizes = [8, 1], strides = [1, 1]} : vector<8x128xf32> to vector<8x1xf32>
    %125 = vector.extract_strided_slice %90 {offsets = [5, 0], sizes = [1, 128], strides = [1, 1]} : vector<16x128xf32> to vector<1x128xf32>
    %126 = vector.broadcast %124 : vector<8x1xf32> to vector<8x128xf32>
    %127 = vector.broadcast %125 : vector<1x128xf32> to vector<8x128xf32>
    %128 = arith.mulf %126, %127 : vector<8x128xf32>
    %129 = arith.addf %123, %128 : vector<8x128xf32>
    %130 = vector.extract_strided_slice %85 {offsets = [0, 6], sizes = [8, 1], strides = [1, 1]} : vector<8x128xf32> to vector<8x1xf32>
    %131 = vector.extract_strided_slice %90 {offsets = [6, 0], sizes = [1, 128], strides = [1, 1]} : vector<16x128xf32> to vector<1x128xf32>
    %132 = vector.broadcast %130 : vector<8x1xf32> to vector<8x128xf32>
    %133 = vector.broadcast %131 : vector<1x128xf32> to vector<8x128xf32>
    %134 = arith.mulf %132, %133 : vector<8x128xf32>
    %135 = arith.addf %129, %134 : vector<8x128xf32>
    %136 = vector.extract_strided_slice %85 {offsets = [0, 7], sizes = [8, 1], strides = [1, 1]} : vector<8x128xf32> to vector<8x1xf32>
    %137 = vector.extract_strided_slice %90 {offsets = [7, 0], sizes = [1, 128], strides = [1, 1]} : vector<16x128xf32> to vector<1x128xf32>
    %138 = vector.broadcast %136 : vector<8x1xf32> to vector<8x128xf32>
    %139 = vector.broadcast %137 : vector<1x128xf32> to vector<8x128xf32>
    %140 = arith.mulf %138, %139 : vector<8x128xf32>
    %141 = arith.addf %135, %140 : vector<8x128xf32>
    %142 = vector.extract_strided_slice %85 {offsets = [0, 8], sizes = [8, 1], strides = [1, 1]} : vector<8x128xf32> to vector<8x1xf32>
    %143 = vector.extract_strided_slice %90 {offsets = [8, 0], sizes = [1, 128], strides = [1, 1]} : vector<16x128xf32> to vector<1x128xf32>
    %144 = vector.broadcast %142 : vector<8x1xf32> to vector<8x128xf32>
    %145 = vector.broadcast %143 : vector<1x128xf32> to vector<8x128xf32>
    %146 = arith.mulf %144, %145 : vector<8x128xf32>
    %147 = arith.addf %141, %146 : vector<8x128xf32>
    %148 = vector.extract_strided_slice %85 {offsets = [0, 9], sizes = [8, 1], strides = [1, 1]} : vector<8x128xf32> to vector<8x1xf32>
    %149 = vector.extract_strided_slice %90 {offsets = [9, 0], sizes = [1, 128], strides = [1, 1]} : vector<16x128xf32> to vector<1x128xf32>
    %150 = vector.broadcast %148 : vector<8x1xf32> to vector<8x128xf32>
    %151 = vector.broadcast %149 : vector<1x128xf32> to vector<8x128xf32>
    %152 = arith.mulf %150, %151 : vector<8x128xf32>
    %153 = arith.addf %147, %152 : vector<8x128xf32>
    %c2_18 = arith.constant 2 : index
    %c0_19 = arith.constant 0 : index
    %c0_20 = arith.constant 0 : index
    %154 = vector.load %arg2[%c2_18, %c0_19, %c0_20] : memref<17x8x128xf32, #tpu.memory_space<vmem>>, vector<1x8x128xf32>
    %155 = vector.shape_cast %154 : vector<1x8x128xf32> to vector<8x128xf32>
    %156 = vector.shape_cast %153 : vector<8x128xf32> to vector<1x8x128xf32>
    tpu.vector_store %arg2[%c2_18, %c0_19, %c0_20], %156 {strides = array<i32>} : memref<17x8x128xf32, #tpu.memory_space<vmem>>, vector<1x8x128xf32>,
    %157 = math.tanh %153 : vector<8x128xf32>
    %c10 = arith.constant 10 : index
    %c0_21 = arith.constant 0 : index
    %c0_22 = arith.constant 0 : index
    %158 = vector.load %arg2[%c10, %c0_21, %c0_22] : memref<17x8x128xf32, #tpu.memory_space<vmem>>, vector<1x8x128xf32>
    %159 = vector.shape_cast %158 : vector<1x8x128xf32> to vector<8x128xf32>
    %160 = vector.shape_cast %157 : vector<8x128xf32> to vector<1x8x128xf32>
    tpu.vector_store %arg2[%c10, %c0_21, %c0_22], %160 {strides = array<i32>} : memref<17x8x128xf32, #tpu.memory_space<vmem>>, vector<1x8x128xf32>,
    %c3 = arith.constant 3 : index
    %c0_23 = arith.constant 0 : index
    %c0_24 = arith.constant 0 : index
    %161 = vector.load %arg1[%c3, %c0_23, %c0_24] : memref<9x16x128xf32, #tpu.memory_space<vmem>>, vector<1x16x128xf32>
    %162 = vector.shape_cast %161 : vector<1x16x128xf32> to vector<16x128xf32>
    %163 = vector.extract_strided_slice %162 {offsets = [10, 0], sizes = [1, 128], strides = [1, 1]} : vector<16x128xf32> to vector<1x128xf32>
    %164 = vector.shape_cast %163 : vector<1x128xf32> to vector<1x128xf32>
    %165 = vector.broadcast %164 : vector<1x128xf32> to vector<8x128xf32>
    %166 = vector.extract_strided_slice %157 {offsets = [0, 0], sizes = [8, 1], strides = [1, 1]} : vector<8x128xf32> to vector<8x1xf32>
    %167 = vector.extract_strided_slice %162 {offsets = [0, 0], sizes = [1, 128], strides = [1, 1]} : vector<16x128xf32> to vector<1x128xf32>
    %168 = vector.broadcast %166 : vector<8x1xf32> to vector<8x128xf32>
    %169 = vector.broadcast %167 : vector<1x128xf32> to vector<8x128xf32>
    %170 = arith.mulf %168, %169 : vector<8x128xf32>
    %171 = arith.addf %165, %170 : vector<8x128xf32>
    %172 = vector.extract_strided_slice %157 {offsets = [0, 1], sizes = [8, 1], strides = [1, 1]} : vector<8x128xf32> to vector<8x1xf32>
    %173 = vector.extract_strided_slice %162 {offsets = [1, 0], sizes = [1, 128], strides = [1, 1]} : vector<16x128xf32> to vector<1x128xf32>
    %174 = vector.broadcast %172 : vector<8x1xf32> to vector<8x128xf32>
    %175 = vector.broadcast %173 : vector<1x128xf32> to vector<8x128xf32>
    %176 = arith.mulf %174, %175 : vector<8x128xf32>
    %177 = arith.addf %171, %176 : vector<8x128xf32>
    %178 = vector.extract_strided_slice %157 {offsets = [0, 2], sizes = [8, 1], strides = [1, 1]} : vector<8x128xf32> to vector<8x1xf32>
    %179 = vector.extract_strided_slice %162 {offsets = [2, 0], sizes = [1, 128], strides = [1, 1]} : vector<16x128xf32> to vector<1x128xf32>
    %180 = vector.broadcast %178 : vector<8x1xf32> to vector<8x128xf32>
    %181 = vector.broadcast %179 : vector<1x128xf32> to vector<8x128xf32>
    %182 = arith.mulf %180, %181 : vector<8x128xf32>
    %183 = arith.addf %177, %182 : vector<8x128xf32>
    %184 = vector.extract_strided_slice %157 {offsets = [0, 3], sizes = [8, 1], strides = [1, 1]} : vector<8x128xf32> to vector<8x1xf32>
    %185 = vector.extract_strided_slice %162 {offsets = [3, 0], sizes = [1, 128], strides = [1, 1]} : vector<16x128xf32> to vector<1x128xf32>
    %186 = vector.broadcast %184 : vector<8x1xf32> to vector<8x128xf32>
    %187 = vector.broadcast %185 : vector<1x128xf32> to vector<8x128xf32>
    %188 = arith.mulf %186, %187 : vector<8x128xf32>
    %189 = arith.addf %183, %188 : vector<8x128xf32>
    %190 = vector.extract_strided_slice %157 {offsets = [0, 4], sizes = [8, 1], strides = [1, 1]} : vector<8x128xf32> to vector<8x1xf32>
    %191 = vector.extract_strided_slice %162 {offsets = [4, 0], sizes = [1, 128], strides = [1, 1]} : vector<16x128xf32> to vector<1x128xf32>
    %192 = vector.broadcast %190 : vector<8x1xf32> to vector<8x128xf32>
    %193 = vector.broadcast %191 : vector<1x128xf32> to vector<8x128xf32>
    %194 = arith.mulf %192, %193 : vector<8x128xf32>
    %195 = arith.addf %189, %194 : vector<8x128xf32>
    %196 = vector.extract_strided_slice %157 {offsets = [0, 5], sizes = [8, 1], strides = [1, 1]} : vector<8x128xf32> to vector<8x1xf32>
    %197 = vector.extract_strided_slice %162 {offsets = [5, 0], sizes = [1, 128], strides = [1, 1]} : vector<16x128xf32> to vector<1x128xf32>
    %198 = vector.broadcast %196 : vector<8x1xf32> to vector<8x128xf32>
    %199 = vector.broadcast %197 : vector<1x128xf32> to vector<8x128xf32>
    %200 = arith.mulf %198, %199 : vector<8x128xf32>
    %201 = arith.addf %195, %200 : vector<8x128xf32>
    %202 = vector.extract_strided_slice %157 {offsets = [0, 6], sizes = [8, 1], strides = [1, 1]} : vector<8x128xf32> to vector<8x1xf32>
    %203 = vector.extract_strided_slice %162 {offsets = [6, 0], sizes = [1, 128], strides = [1, 1]} : vector<16x128xf32> to vector<1x128xf32>
    %204 = vector.broadcast %202 : vector<8x1xf32> to vector<8x128xf32>
    %205 = vector.broadcast %203 : vector<1x128xf32> to vector<8x128xf32>
    %206 = arith.mulf %204, %205 : vector<8x128xf32>
    %207 = arith.addf %201, %206 : vector<8x128xf32>
    %208 = vector.extract_strided_slice %157 {offsets = [0, 7], sizes = [8, 1], strides = [1, 1]} : vector<8x128xf32> to vector<8x1xf32>
    %209 = vector.extract_strided_slice %162 {offsets = [7, 0], sizes = [1, 128], strides = [1, 1]} : vector<16x128xf32> to vector<1x128xf32>
    %210 = vector.broadcast %208 : vector<8x1xf32> to vector<8x128xf32>
    %211 = vector.broadcast %209 : vector<1x128xf32> to vector<8x128xf32>
    %212 = arith.mulf %210, %211 : vector<8x128xf32>
    %213 = arith.addf %207, %212 : vector<8x128xf32>
    %214 = vector.extract_strided_slice %157 {offsets = [0, 8], sizes = [8, 1], strides = [1, 1]} : vector<8x128xf32> to vector<8x1xf32>
    %215 = vector.extract_strided_slice %162 {offsets = [8, 0], sizes = [1, 128], strides = [1, 1]} : vector<16x128xf32> to vector<1x128xf32>
    %216 = vector.broadcast %214 : vector<8x1xf32> to vector<8x128xf32>
    %217 = vector.broadcast %215 : vector<1x128xf32> to vector<8x128xf32>
    %218 = arith.mulf %216, %217 : vector<8x128xf32>
    %219 = arith.addf %213, %218 : vector<8x128xf32>
    %220 = vector.extract_strided_slice %157 {offsets = [0, 9], sizes = [8, 1], strides = [1, 1]} : vector<8x128xf32> to vector<8x1xf32>
    %221 = vector.extract_strided_slice %162 {offsets = [9, 0], sizes = [1, 128], strides = [1, 1]} : vector<16x128xf32> to vector<1x128xf32>
    %222 = vector.broadcast %220 : vector<8x1xf32> to vector<8x128xf32>
    %223 = vector.broadcast %221 : vector<1x128xf32> to vector<8x128xf32>
    %224 = arith.mulf %222, %223 : vector<8x128xf32>
    %225 = arith.addf %219, %224 : vector<8x128xf32>
    %c3_25 = arith.constant 3 : index
    %c0_26 = arith.constant 0 : index
    %c0_27 = arith.constant 0 : index
    %226 = vector.load %arg2[%c3_25, %c0_26, %c0_27] : memref<17x8x128xf32, #tpu.memory_space<vmem>>, vector<1x8x128xf32>
    %227 = vector.shape_cast %226 : vector<1x8x128xf32> to vector<8x128xf32>
    %228 = vector.shape_cast %225 : vector<8x128xf32> to vector<1x8x128xf32>
    tpu.vector_store %arg2[%c3_25, %c0_26, %c0_27], %228 {strides = array<i32>} : memref<17x8x128xf32, #tpu.memory_space<vmem>>, vector<1x8x128xf32>,
    %229 = math.tanh %225 : vector<8x128xf32>
    %c11 = arith.constant 11 : index
    %c0_28 = arith.constant 0 : index
    %c0_29 = arith.constant 0 : index
    %230 = vector.load %arg2[%c11, %c0_28, %c0_29] : memref<17x8x128xf32, #tpu.memory_space<vmem>>, vector<1x8x128xf32>
    %231 = vector.shape_cast %230 : vector<1x8x128xf32> to vector<8x128xf32>
    %232 = vector.shape_cast %229 : vector<8x128xf32> to vector<1x8x128xf32>
    tpu.vector_store %arg2[%c11, %c0_28, %c0_29], %232 {strides = array<i32>} : memref<17x8x128xf32, #tpu.memory_space<vmem>>, vector<1x8x128xf32>,
    %c4 = arith.constant 4 : index
    %c0_30 = arith.constant 0 : index
    %c0_31 = arith.constant 0 : index
    %233 = vector.load %arg1[%c4, %c0_30, %c0_31] : memref<9x16x128xf32, #tpu.memory_space<vmem>>, vector<1x16x128xf32>
    %234 = vector.shape_cast %233 : vector<1x16x128xf32> to vector<16x128xf32>
    %235 = vector.extract_strided_slice %234 {offsets = [10, 0], sizes = [1, 128], strides = [1, 1]} : vector<16x128xf32> to vector<1x128xf32>
    %236 = vector.shape_cast %235 : vector<1x128xf32> to vector<1x128xf32>
    %237 = vector.broadcast %236 : vector<1x128xf32> to vector<8x128xf32>
    %238 = vector.extract_strided_slice %229 {offsets = [0, 0], sizes = [8, 1], strides = [1, 1]} : vector<8x128xf32> to vector<8x1xf32>
    %239 = vector.extract_strided_slice %234 {offsets = [0, 0], sizes = [1, 128], strides = [1, 1]} : vector<16x128xf32> to vector<1x128xf32>
    %240 = vector.broadcast %238 : vector<8x1xf32> to vector<8x128xf32>
    %241 = vector.broadcast %239 : vector<1x128xf32> to vector<8x128xf32>
    %242 = arith.mulf %240, %241 : vector<8x128xf32>
    %243 = arith.addf %237, %242 : vector<8x128xf32>
    %244 = vector.extract_strided_slice %229 {offsets = [0, 1], sizes = [8, 1], strides = [1, 1]} : vector<8x128xf32> to vector<8x1xf32>
    %245 = vector.extract_strided_slice %234 {offsets = [1, 0], sizes = [1, 128], strides = [1, 1]} : vector<16x128xf32> to vector<1x128xf32>
    %246 = vector.broadcast %244 : vector<8x1xf32> to vector<8x128xf32>
    %247 = vector.broadcast %245 : vector<1x128xf32> to vector<8x128xf32>
    %248 = arith.mulf %246, %247 : vector<8x128xf32>
    %249 = arith.addf %243, %248 : vector<8x128xf32>
    %250 = vector.extract_strided_slice %229 {offsets = [0, 2], sizes = [8, 1], strides = [1, 1]} : vector<8x128xf32> to vector<8x1xf32>
    %251 = vector.extract_strided_slice %234 {offsets = [2, 0], sizes = [1, 128], strides = [1, 1]} : vector<16x128xf32> to vector<1x128xf32>
    %252 = vector.broadcast %250 : vector<8x1xf32> to vector<8x128xf32>
    %253 = vector.broadcast %251 : vector<1x128xf32> to vector<8x128xf32>
    %254 = arith.mulf %252, %253 : vector<8x128xf32>
    %255 = arith.addf %249, %254 : vector<8x128xf32>
    %256 = vector.extract_strided_slice %229 {offsets = [0, 3], sizes = [8, 1], strides = [1, 1]} : vector<8x128xf32> to vector<8x1xf32>
    %257 = vector.extract_strided_slice %234 {offsets = [3, 0], sizes = [1, 128], strides = [1, 1]} : vector<16x128xf32> to vector<1x128xf32>
    %258 = vector.broadcast %256 : vector<8x1xf32> to vector<8x128xf32>
    %259 = vector.broadcast %257 : vector<1x128xf32> to vector<8x128xf32>
    %260 = arith.mulf %258, %259 : vector<8x128xf32>
    %261 = arith.addf %255, %260 : vector<8x128xf32>
    %262 = vector.extract_strided_slice %229 {offsets = [0, 4], sizes = [8, 1], strides = [1, 1]} : vector<8x128xf32> to vector<8x1xf32>
    %263 = vector.extract_strided_slice %234 {offsets = [4, 0], sizes = [1, 128], strides = [1, 1]} : vector<16x128xf32> to vector<1x128xf32>
    %264 = vector.broadcast %262 : vector<8x1xf32> to vector<8x128xf32>
    %265 = vector.broadcast %263 : vector<1x128xf32> to vector<8x128xf32>
    %266 = arith.mulf %264, %265 : vector<8x128xf32>
    %267 = arith.addf %261, %266 : vector<8x128xf32>
    %268 = vector.extract_strided_slice %229 {offsets = [0, 5], sizes = [8, 1], strides = [1, 1]} : vector<8x128xf32> to vector<8x1xf32>
    %269 = vector.extract_strided_slice %234 {offsets = [5, 0], sizes = [1, 128], strides = [1, 1]} : vector<16x128xf32> to vector<1x128xf32>
    %270 = vector.broadcast %268 : vector<8x1xf32> to vector<8x128xf32>
    %271 = vector.broadcast %269 : vector<1x128xf32> to vector<8x128xf32>
    %272 = arith.mulf %270, %271 : vector<8x128xf32>
    %273 = arith.addf %267, %272 : vector<8x128xf32>
    %274 = vector.extract_strided_slice %229 {offsets = [0, 6], sizes = [8, 1], strides = [1, 1]} : vector<8x128xf32> to vector<8x1xf32>
    %275 = vector.extract_strided_slice %234 {offsets = [6, 0], sizes = [1, 128], strides = [1, 1]} : vector<16x128xf32> to vector<1x128xf32>
    %276 = vector.broadcast %274 : vector<8x1xf32> to vector<8x128xf32>
    %277 = vector.broadcast %275 : vector<1x128xf32> to vector<8x128xf32>
    %278 = arith.mulf %276, %277 : vector<8x128xf32>
    %279 = arith.addf %273, %278 : vector<8x128xf32>
    %280 = vector.extract_strided_slice %229 {offsets = [0, 7], sizes = [8, 1], strides = [1, 1]} : vector<8x128xf32> to vector<8x1xf32>
    %281 = vector.extract_strided_slice %234 {offsets = [7, 0], sizes = [1, 128], strides = [1, 1]} : vector<16x128xf32> to vector<1x128xf32>
    %282 = vector.broadcast %280 : vector<8x1xf32> to vector<8x128xf32>
    %283 = vector.broadcast %281 : vector<1x128xf32> to vector<8x128xf32>
    %284 = arith.mulf %282, %283 : vector<8x128xf32>
    %285 = arith.addf %279, %284 : vector<8x128xf32>
    %286 = vector.extract_strided_slice %229 {offsets = [0, 8], sizes = [8, 1], strides = [1, 1]} : vector<8x128xf32> to vector<8x1xf32>
    %287 = vector.extract_strided_slice %234 {offsets = [8, 0], sizes = [1, 128], strides = [1, 1]} : vector<16x128xf32> to vector<1x128xf32>
    %288 = vector.broadcast %286 : vector<8x1xf32> to vector<8x128xf32>
    %289 = vector.broadcast %287 : vector<1x128xf32> to vector<8x128xf32>
    %290 = arith.mulf %288, %289 : vector<8x128xf32>
    %291 = arith.addf %285, %290 : vector<8x128xf32>
    %292 = vector.extract_strided_slice %229 {offsets = [0, 9], sizes = [8, 1], strides = [1, 1]} : vector<8x128xf32> to vector<8x1xf32>
    %293 = vector.extract_strided_slice %234 {offsets = [9, 0], sizes = [1, 128], strides = [1, 1]} : vector<16x128xf32> to vector<1x128xf32>
    %294 = vector.broadcast %292 : vector<8x1xf32> to vector<8x128xf32>
    %295 = vector.broadcast %293 : vector<1x128xf32> to vector<8x128xf32>
    %296 = arith.mulf %294, %295 : vector<8x128xf32>
    %297 = arith.addf %291, %296 : vector<8x128xf32>
    %c4_32 = arith.constant 4 : index
    %c0_33 = arith.constant 0 : index
    %c0_34 = arith.constant 0 : index
    %298 = vector.load %arg2[%c4_32, %c0_33, %c0_34] : memref<17x8x128xf32, #tpu.memory_space<vmem>>, vector<1x8x128xf32>
    %299 = vector.shape_cast %298 : vector<1x8x128xf32> to vector<8x128xf32>
    %300 = vector.shape_cast %297 : vector<8x128xf32> to vector<1x8x128xf32>
    tpu.vector_store %arg2[%c4_32, %c0_33, %c0_34], %300 {strides = array<i32>} : memref<17x8x128xf32, #tpu.memory_space<vmem>>, vector<1x8x128xf32>,
    %301 = math.tanh %297 : vector<8x128xf32>
    %c12 = arith.constant 12 : index
    %c0_35 = arith.constant 0 : index
    %c0_36 = arith.constant 0 : index
    %302 = vector.load %arg2[%c12, %c0_35, %c0_36] : memref<17x8x128xf32, #tpu.memory_space<vmem>>, vector<1x8x128xf32>
    %303 = vector.shape_cast %302 : vector<1x8x128xf32> to vector<8x128xf32>
    %304 = vector.shape_cast %301 : vector<8x128xf32> to vector<1x8x128xf32>
    tpu.vector_store %arg2[%c12, %c0_35, %c0_36], %304 {strides = array<i32>} : memref<17x8x128xf32, #tpu.memory_space<vmem>>, vector<1x8x128xf32>,
    %c5 = arith.constant 5 : index
    %c0_37 = arith.constant 0 : index
    %c0_38 = arith.constant 0 : index
    %305 = vector.load %arg1[%c5, %c0_37, %c0_38] : memref<9x16x128xf32, #tpu.memory_space<vmem>>, vector<1x16x128xf32>
    %306 = vector.shape_cast %305 : vector<1x16x128xf32> to vector<16x128xf32>
    %307 = vector.extract_strided_slice %306 {offsets = [10, 0], sizes = [1, 128], strides = [1, 1]} : vector<16x128xf32> to vector<1x128xf32>
    %308 = vector.shape_cast %307 : vector<1x128xf32> to vector<1x128xf32>
    %309 = vector.broadcast %308 : vector<1x128xf32> to vector<8x128xf32>
    %310 = vector.extract_strided_slice %301 {offsets = [0, 0], sizes = [8, 1], strides = [1, 1]} : vector<8x128xf32> to vector<8x1xf32>
    %311 = vector.extract_strided_slice %306 {offsets = [0, 0], sizes = [1, 128], strides = [1, 1]} : vector<16x128xf32> to vector<1x128xf32>
    %312 = vector.broadcast %310 : vector<8x1xf32> to vector<8x128xf32>
    %313 = vector.broadcast %311 : vector<1x128xf32> to vector<8x128xf32>
    %314 = arith.mulf %312, %313 : vector<8x128xf32>
    %315 = arith.addf %309, %314 : vector<8x128xf32>
    %316 = vector.extract_strided_slice %301 {offsets = [0, 1], sizes = [8, 1], strides = [1, 1]} : vector<8x128xf32> to vector<8x1xf32>
    %317 = vector.extract_strided_slice %306 {offsets = [1, 0], sizes = [1, 128], strides = [1, 1]} : vector<16x128xf32> to vector<1x128xf32>
    %318 = vector.broadcast %316 : vector<8x1xf32> to vector<8x128xf32>
    %319 = vector.broadcast %317 : vector<1x128xf32> to vector<8x128xf32>
    %320 = arith.mulf %318, %319 : vector<8x128xf32>
    %321 = arith.addf %315, %320 : vector<8x128xf32>
    %322 = vector.extract_strided_slice %301 {offsets = [0, 2], sizes = [8, 1], strides = [1, 1]} : vector<8x128xf32> to vector<8x1xf32>
    %323 = vector.extract_strided_slice %306 {offsets = [2, 0], sizes = [1, 128], strides = [1, 1]} : vector<16x128xf32> to vector<1x128xf32>
    %324 = vector.broadcast %322 : vector<8x1xf32> to vector<8x128xf32>
    %325 = vector.broadcast %323 : vector<1x128xf32> to vector<8x128xf32>
    %326 = arith.mulf %324, %325 : vector<8x128xf32>
    %327 = arith.addf %321, %326 : vector<8x128xf32>
    %328 = vector.extract_strided_slice %301 {offsets = [0, 3], sizes = [8, 1], strides = [1, 1]} : vector<8x128xf32> to vector<8x1xf32>
    %329 = vector.extract_strided_slice %306 {offsets = [3, 0], sizes = [1, 128], strides = [1, 1]} : vector<16x128xf32> to vector<1x128xf32>
    %330 = vector.broadcast %328 : vector<8x1xf32> to vector<8x128xf32>
    %331 = vector.broadcast %329 : vector<1x128xf32> to vector<8x128xf32>
    %332 = arith.mulf %330, %331 : vector<8x128xf32>
    %333 = arith.addf %327, %332 : vector<8x128xf32>
    %334 = vector.extract_strided_slice %301 {offsets = [0, 4], sizes = [8, 1], strides = [1, 1]} : vector<8x128xf32> to vector<8x1xf32>
    %335 = vector.extract_strided_slice %306 {offsets = [4, 0], sizes = [1, 128], strides = [1, 1]} : vector<16x128xf32> to vector<1x128xf32>
    %336 = vector.broadcast %334 : vector<8x1xf32> to vector<8x128xf32>
    %337 = vector.broadcast %335 : vector<1x128xf32> to vector<8x128xf32>
    %338 = arith.mulf %336, %337 : vector<8x128xf32>
    %339 = arith.addf %333, %338 : vector<8x128xf32>
    %340 = vector.extract_strided_slice %301 {offsets = [0, 5], sizes = [8, 1], strides = [1, 1]} : vector<8x128xf32> to vector<8x1xf32>
    %341 = vector.extract_strided_slice %306 {offsets = [5, 0], sizes = [1, 128], strides = [1, 1]} : vector<16x128xf32> to vector<1x128xf32>
    %342 = vector.broadcast %340 : vector<8x1xf32> to vector<8x128xf32>
    %343 = vector.broadcast %341 : vector<1x128xf32> to vector<8x128xf32>
    %344 = arith.mulf %342, %343 : vector<8x128xf32>
    %345 = arith.addf %339, %344 : vector<8x128xf32>
    %346 = vector.extract_strided_slice %301 {offsets = [0, 6], sizes = [8, 1], strides = [1, 1]} : vector<8x128xf32> to vector<8x1xf32>
    %347 = vector.extract_strided_slice %306 {offsets = [6, 0], sizes = [1, 128], strides = [1, 1]} : vector<16x128xf32> to vector<1x128xf32>
    %348 = vector.broadcast %346 : vector<8x1xf32> to vector<8x128xf32>
    %349 = vector.broadcast %347 : vector<1x128xf32> to vector<8x128xf32>
    %350 = arith.mulf %348, %349 : vector<8x128xf32>
    %351 = arith.addf %345, %350 : vector<8x128xf32>
    %352 = vector.extract_strided_slice %301 {offsets = [0, 7], sizes = [8, 1], strides = [1, 1]} : vector<8x128xf32> to vector<8x1xf32>
    %353 = vector.extract_strided_slice %306 {offsets = [7, 0], sizes = [1, 128], strides = [1, 1]} : vector<16x128xf32> to vector<1x128xf32>
    %354 = vector.broadcast %352 : vector<8x1xf32> to vector<8x128xf32>
    %355 = vector.broadcast %353 : vector<1x128xf32> to vector<8x128xf32>
    %356 = arith.mulf %354, %355 : vector<8x128xf32>
    %357 = arith.addf %351, %356 : vector<8x128xf32>
    %358 = vector.extract_strided_slice %301 {offsets = [0, 8], sizes = [8, 1], strides = [1, 1]} : vector<8x128xf32> to vector<8x1xf32>
    %359 = vector.extract_strided_slice %306 {offsets = [8, 0], sizes = [1, 128], strides = [1, 1]} : vector<16x128xf32> to vector<1x128xf32>
    %360 = vector.broadcast %358 : vector<8x1xf32> to vector<8x128xf32>
    %361 = vector.broadcast %359 : vector<1x128xf32> to vector<8x128xf32>
    %362 = arith.mulf %360, %361 : vector<8x128xf32>
    %363 = arith.addf %357, %362 : vector<8x128xf32>
    %364 = vector.extract_strided_slice %301 {offsets = [0, 9], sizes = [8, 1], strides = [1, 1]} : vector<8x128xf32> to vector<8x1xf32>
    %365 = vector.extract_strided_slice %306 {offsets = [9, 0], sizes = [1, 128], strides = [1, 1]} : vector<16x128xf32> to vector<1x128xf32>
    %366 = vector.broadcast %364 : vector<8x1xf32> to vector<8x128xf32>
    %367 = vector.broadcast %365 : vector<1x128xf32> to vector<8x128xf32>
    %368 = arith.mulf %366, %367 : vector<8x128xf32>
    %369 = arith.addf %363, %368 : vector<8x128xf32>
    %c5_39 = arith.constant 5 : index
    %c0_40 = arith.constant 0 : index
    %c0_41 = arith.constant 0 : index
    %370 = vector.load %arg2[%c5_39, %c0_40, %c0_41] : memref<17x8x128xf32, #tpu.memory_space<vmem>>, vector<1x8x128xf32>
    %371 = vector.shape_cast %370 : vector<1x8x128xf32> to vector<8x128xf32>
    %372 = vector.shape_cast %369 : vector<8x128xf32> to vector<1x8x128xf32>
    tpu.vector_store %arg2[%c5_39, %c0_40, %c0_41], %372 {strides = array<i32>} : memref<17x8x128xf32, #tpu.memory_space<vmem>>, vector<1x8x128xf32>,
    %373 = math.tanh %369 : vector<8x128xf32>
    %c13 = arith.constant 13 : index
    %c0_42 = arith.constant 0 : index
    %c0_43 = arith.constant 0 : index
    %374 = vector.load %arg2[%c13, %c0_42, %c0_43] : memref<17x8x128xf32, #tpu.memory_space<vmem>>, vector<1x8x128xf32>
    %375 = vector.shape_cast %374 : vector<1x8x128xf32> to vector<8x128xf32>
    %376 = vector.shape_cast %373 : vector<8x128xf32> to vector<1x8x128xf32>
    tpu.vector_store %arg2[%c13, %c0_42, %c0_43], %376 {strides = array<i32>} : memref<17x8x128xf32, #tpu.memory_space<vmem>>, vector<1x8x128xf32>,
    %c6 = arith.constant 6 : index
    %c0_44 = arith.constant 0 : index
    %c0_45 = arith.constant 0 : index
    %377 = vector.load %arg1[%c6, %c0_44, %c0_45] : memref<9x16x128xf32, #tpu.memory_space<vmem>>, vector<1x16x128xf32>
    %378 = vector.shape_cast %377 : vector<1x16x128xf32> to vector<16x128xf32>
    %379 = vector.extract_strided_slice %378 {offsets = [10, 0], sizes = [1, 128], strides = [1, 1]} : vector<16x128xf32> to vector<1x128xf32>
    %380 = vector.shape_cast %379 : vector<1x128xf32> to vector<1x128xf32>
    %381 = vector.broadcast %380 : vector<1x128xf32> to vector<8x128xf32>
    %382 = vector.extract_strided_slice %373 {offsets = [0, 0], sizes = [8, 1], strides = [1, 1]} : vector<8x128xf32> to vector<8x1xf32>
    %383 = vector.extract_strided_slice %378 {offsets = [0, 0], sizes = [1, 128], strides = [1, 1]} : vector<16x128xf32> to vector<1x128xf32>
    %384 = vector.broadcast %382 : vector<8x1xf32> to vector<8x128xf32>
    %385 = vector.broadcast %383 : vector<1x128xf32> to vector<8x128xf32>
    %386 = arith.mulf %384, %385 : vector<8x128xf32>
    %387 = arith.addf %381, %386 : vector<8x128xf32>
    %388 = vector.extract_strided_slice %373 {offsets = [0, 1], sizes = [8, 1], strides = [1, 1]} : vector<8x128xf32> to vector<8x1xf32>
    %389 = vector.extract_strided_slice %378 {offsets = [1, 0], sizes = [1, 128], strides = [1, 1]} : vector<16x128xf32> to vector<1x128xf32>
    %390 = vector.broadcast %388 : vector<8x1xf32> to vector<8x128xf32>
    %391 = vector.broadcast %389 : vector<1x128xf32> to vector<8x128xf32>
    %392 = arith.mulf %390, %391 : vector<8x128xf32>
    %393 = arith.addf %387, %392 : vector<8x128xf32>
    %394 = vector.extract_strided_slice %373 {offsets = [0, 2], sizes = [8, 1], strides = [1, 1]} : vector<8x128xf32> to vector<8x1xf32>
    %395 = vector.extract_strided_slice %378 {offsets = [2, 0], sizes = [1, 128], strides = [1, 1]} : vector<16x128xf32> to vector<1x128xf32>
    %396 = vector.broadcast %394 : vector<8x1xf32> to vector<8x128xf32>
    %397 = vector.broadcast %395 : vector<1x128xf32> to vector<8x128xf32>
    %398 = arith.mulf %396, %397 : vector<8x128xf32>
    %399 = arith.addf %393, %398 : vector<8x128xf32>
    %400 = vector.extract_strided_slice %373 {offsets = [0, 3], sizes = [8, 1], strides = [1, 1]} : vector<8x128xf32> to vector<8x1xf32>
    %401 = vector.extract_strided_slice %378 {offsets = [3, 0], sizes = [1, 128], strides = [1, 1]} : vector<16x128xf32> to vector<1x128xf32>
    %402 = vector.broadcast %400 : vector<8x1xf32> to vector<8x128xf32>
    %403 = vector.broadcast %401 : vector<1x128xf32> to vector<8x128xf32>
    %404 = arith.mulf %402, %403 : vector<8x128xf32>
    %405 = arith.addf %399, %404 : vector<8x128xf32>
    %406 = vector.extract_strided_slice %373 {offsets = [0, 4], sizes = [8, 1], strides = [1, 1]} : vector<8x128xf32> to vector<8x1xf32>
    %407 = vector.extract_strided_slice %378 {offsets = [4, 0], sizes = [1, 128], strides = [1, 1]} : vector<16x128xf32> to vector<1x128xf32>
    %408 = vector.broadcast %406 : vector<8x1xf32> to vector<8x128xf32>
    %409 = vector.broadcast %407 : vector<1x128xf32> to vector<8x128xf32>
    %410 = arith.mulf %408, %409 : vector<8x128xf32>
    %411 = arith.addf %405, %410 : vector<8x128xf32>
    %412 = vector.extract_strided_slice %373 {offsets = [0, 5], sizes = [8, 1], strides = [1, 1]} : vector<8x128xf32> to vector<8x1xf32>
    %413 = vector.extract_strided_slice %378 {offsets = [5, 0], sizes = [1, 128], strides = [1, 1]} : vector<16x128xf32> to vector<1x128xf32>
    %414 = vector.broadcast %412 : vector<8x1xf32> to vector<8x128xf32>
    %415 = vector.broadcast %413 : vector<1x128xf32> to vector<8x128xf32>
    %416 = arith.mulf %414, %415 : vector<8x128xf32>
    %417 = arith.addf %411, %416 : vector<8x128xf32>
    %418 = vector.extract_strided_slice %373 {offsets = [0, 6], sizes = [8, 1], strides = [1, 1]} : vector<8x128xf32> to vector<8x1xf32>
    %419 = vector.extract_strided_slice %378 {offsets = [6, 0], sizes = [1, 128], strides = [1, 1]} : vector<16x128xf32> to vector<1x128xf32>
    %420 = vector.broadcast %418 : vector<8x1xf32> to vector<8x128xf32>
    %421 = vector.broadcast %419 : vector<1x128xf32> to vector<8x128xf32>
    %422 = arith.mulf %420, %421 : vector<8x128xf32>
    %423 = arith.addf %417, %422 : vector<8x128xf32>
    %424 = vector.extract_strided_slice %373 {offsets = [0, 7], sizes = [8, 1], strides = [1, 1]} : vector<8x128xf32> to vector<8x1xf32>
    %425 = vector.extract_strided_slice %378 {offsets = [7, 0], sizes = [1, 128], strides = [1, 1]} : vector<16x128xf32> to vector<1x128xf32>
    %426 = vector.broadcast %424 : vector<8x1xf32> to vector<8x128xf32>
    %427 = vector.broadcast %425 : vector<1x128xf32> to vector<8x128xf32>
    %428 = arith.mulf %426, %427 : vector<8x128xf32>
    %429 = arith.addf %423, %428 : vector<8x128xf32>
    %430 = vector.extract_strided_slice %373 {offsets = [0, 8], sizes = [8, 1], strides = [1, 1]} : vector<8x128xf32> to vector<8x1xf32>
    %431 = vector.extract_strided_slice %378 {offsets = [8, 0], sizes = [1, 128], strides = [1, 1]} : vector<16x128xf32> to vector<1x128xf32>
    %432 = vector.broadcast %430 : vector<8x1xf32> to vector<8x128xf32>
    %433 = vector.broadcast %431 : vector<1x128xf32> to vector<8x128xf32>
    %434 = arith.mulf %432, %433 : vector<8x128xf32>
    %435 = arith.addf %429, %434 : vector<8x128xf32>
    %436 = vector.extract_strided_slice %373 {offsets = [0, 9], sizes = [8, 1], strides = [1, 1]} : vector<8x128xf32> to vector<8x1xf32>
    %437 = vector.extract_strided_slice %378 {offsets = [9, 0], sizes = [1, 128], strides = [1, 1]} : vector<16x128xf32> to vector<1x128xf32>
    %438 = vector.broadcast %436 : vector<8x1xf32> to vector<8x128xf32>
    %439 = vector.broadcast %437 : vector<1x128xf32> to vector<8x128xf32>
    %440 = arith.mulf %438, %439 : vector<8x128xf32>
    %441 = arith.addf %435, %440 : vector<8x128xf32>
    %c6_46 = arith.constant 6 : index
    %c0_47 = arith.constant 0 : index
    %c0_48 = arith.constant 0 : index
    %442 = vector.load %arg2[%c6_46, %c0_47, %c0_48] : memref<17x8x128xf32, #tpu.memory_space<vmem>>, vector<1x8x128xf32>
    %443 = vector.shape_cast %442 : vector<1x8x128xf32> to vector<8x128xf32>
    %444 = vector.shape_cast %441 : vector<8x128xf32> to vector<1x8x128xf32>
    tpu.vector_store %arg2[%c6_46, %c0_47, %c0_48], %444 {strides = array<i32>} : memref<17x8x128xf32, #tpu.memory_space<vmem>>, vector<1x8x128xf32>,
    %445 = math.tanh %441 : vector<8x128xf32>
    %c14 = arith.constant 14 : index
    %c0_49 = arith.constant 0 : index
    %c0_50 = arith.constant 0 : index
    %446 = vector.load %arg2[%c14, %c0_49, %c0_50] : memref<17x8x128xf32, #tpu.memory_space<vmem>>, vector<1x8x128xf32>
    %447 = vector.shape_cast %446 : vector<1x8x128xf32> to vector<8x128xf32>
    %448 = vector.shape_cast %445 : vector<8x128xf32> to vector<1x8x128xf32>
    tpu.vector_store %arg2[%c14, %c0_49, %c0_50], %448 {strides = array<i32>} : memref<17x8x128xf32, #tpu.memory_space<vmem>>, vector<1x8x128xf32>,
    %c7 = arith.constant 7 : index
    %c0_51 = arith.constant 0 : index
    %c0_52 = arith.constant 0 : index
    %449 = vector.load %arg1[%c7, %c0_51, %c0_52] : memref<9x16x128xf32, #tpu.memory_space<vmem>>, vector<1x16x128xf32>
    %450 = vector.shape_cast %449 : vector<1x16x128xf32> to vector<16x128xf32>
    %451 = vector.extract_strided_slice %450 {offsets = [10, 0], sizes = [1, 128], strides = [1, 1]} : vector<16x128xf32> to vector<1x128xf32>
    %452 = vector.shape_cast %451 : vector<1x128xf32> to vector<1x128xf32>
    %453 = vector.broadcast %452 : vector<1x128xf32> to vector<8x128xf32>
    %454 = vector.extract_strided_slice %445 {offsets = [0, 0], sizes = [8, 1], strides = [1, 1]} : vector<8x128xf32> to vector<8x1xf32>
    %455 = vector.extract_strided_slice %450 {offsets = [0, 0], sizes = [1, 128], strides = [1, 1]} : vector<16x128xf32> to vector<1x128xf32>
    %456 = vector.broadcast %454 : vector<8x1xf32> to vector<8x128xf32>
    %457 = vector.broadcast %455 : vector<1x128xf32> to vector<8x128xf32>
    %458 = arith.mulf %456, %457 : vector<8x128xf32>
    %459 = arith.addf %453, %458 : vector<8x128xf32>
    %460 = vector.extract_strided_slice %445 {offsets = [0, 1], sizes = [8, 1], strides = [1, 1]} : vector<8x128xf32> to vector<8x1xf32>
    %461 = vector.extract_strided_slice %450 {offsets = [1, 0], sizes = [1, 128], strides = [1, 1]} : vector<16x128xf32> to vector<1x128xf32>
    %462 = vector.broadcast %460 : vector<8x1xf32> to vector<8x128xf32>
    %463 = vector.broadcast %461 : vector<1x128xf32> to vector<8x128xf32>
    %464 = arith.mulf %462, %463 : vector<8x128xf32>
    %465 = arith.addf %459, %464 : vector<8x128xf32>
    %466 = vector.extract_strided_slice %445 {offsets = [0, 2], sizes = [8, 1], strides = [1, 1]} : vector<8x128xf32> to vector<8x1xf32>
    %467 = vector.extract_strided_slice %450 {offsets = [2, 0], sizes = [1, 128], strides = [1, 1]} : vector<16x128xf32> to vector<1x128xf32>
    %468 = vector.broadcast %466 : vector<8x1xf32> to vector<8x128xf32>
    %469 = vector.broadcast %467 : vector<1x128xf32> to vector<8x128xf32>
    %470 = arith.mulf %468, %469 : vector<8x128xf32>
    %471 = arith.addf %465, %470 : vector<8x128xf32>
    %472 = vector.extract_strided_slice %445 {offsets = [0, 3], sizes = [8, 1], strides = [1, 1]} : vector<8x128xf32> to vector<8x1xf32>
    %473 = vector.extract_strided_slice %450 {offsets = [3, 0], sizes = [1, 128], strides = [1, 1]} : vector<16x128xf32> to vector<1x128xf32>
    %474 = vector.broadcast %472 : vector<8x1xf32> to vector<8x128xf32>
    %475 = vector.broadcast %473 : vector<1x128xf32> to vector<8x128xf32>
    %476 = arith.mulf %474, %475 : vector<8x128xf32>
    %477 = arith.addf %471, %476 : vector<8x128xf32>
    %478 = vector.extract_strided_slice %445 {offsets = [0, 4], sizes = [8, 1], strides = [1, 1]} : vector<8x128xf32> to vector<8x1xf32>
    %479 = vector.extract_strided_slice %450 {offsets = [4, 0], sizes = [1, 128], strides = [1, 1]} : vector<16x128xf32> to vector<1x128xf32>
    %480 = vector.broadcast %478 : vector<8x1xf32> to vector<8x128xf32>
    %481 = vector.broadcast %479 : vector<1x128xf32> to vector<8x128xf32>
    %482 = arith.mulf %480, %481 : vector<8x128xf32>
    %483 = arith.addf %477, %482 : vector<8x128xf32>
    %484 = vector.extract_strided_slice %445 {offsets = [0, 5], sizes = [8, 1], strides = [1, 1]} : vector<8x128xf32> to vector<8x1xf32>
    %485 = vector.extract_strided_slice %450 {offsets = [5, 0], sizes = [1, 128], strides = [1, 1]} : vector<16x128xf32> to vector<1x128xf32>
    %486 = vector.broadcast %484 : vector<8x1xf32> to vector<8x128xf32>
    %487 = vector.broadcast %485 : vector<1x128xf32> to vector<8x128xf32>
    %488 = arith.mulf %486, %487 : vector<8x128xf32>
    %489 = arith.addf %483, %488 : vector<8x128xf32>
    %490 = vector.extract_strided_slice %445 {offsets = [0, 6], sizes = [8, 1], strides = [1, 1]} : vector<8x128xf32> to vector<8x1xf32>
    %491 = vector.extract_strided_slice %450 {offsets = [6, 0], sizes = [1, 128], strides = [1, 1]} : vector<16x128xf32> to vector<1x128xf32>
    %492 = vector.broadcast %490 : vector<8x1xf32> to vector<8x128xf32>
    %493 = vector.broadcast %491 : vector<1x128xf32> to vector<8x128xf32>
    %494 = arith.mulf %492, %493 : vector<8x128xf32>
    %495 = arith.addf %489, %494 : vector<8x128xf32>
    %496 = vector.extract_strided_slice %445 {offsets = [0, 7], sizes = [8, 1], strides = [1, 1]} : vector<8x128xf32> to vector<8x1xf32>
    %497 = vector.extract_strided_slice %450 {offsets = [7, 0], sizes = [1, 128], strides = [1, 1]} : vector<16x128xf32> to vector<1x128xf32>
    %498 = vector.broadcast %496 : vector<8x1xf32> to vector<8x128xf32>
    %499 = vector.broadcast %497 : vector<1x128xf32> to vector<8x128xf32>
    %500 = arith.mulf %498, %499 : vector<8x128xf32>
    %501 = arith.addf %495, %500 : vector<8x128xf32>
    %502 = vector.extract_strided_slice %445 {offsets = [0, 8], sizes = [8, 1], strides = [1, 1]} : vector<8x128xf32> to vector<8x1xf32>
    %503 = vector.extract_strided_slice %450 {offsets = [8, 0], sizes = [1, 128], strides = [1, 1]} : vector<16x128xf32> to vector<1x128xf32>
    %504 = vector.broadcast %502 : vector<8x1xf32> to vector<8x128xf32>
    %505 = vector.broadcast %503 : vector<1x128xf32> to vector<8x128xf32>
    %506 = arith.mulf %504, %505 : vector<8x128xf32>
    %507 = arith.addf %501, %506 : vector<8x128xf32>
    %508 = vector.extract_strided_slice %445 {offsets = [0, 9], sizes = [8, 1], strides = [1, 1]} : vector<8x128xf32> to vector<8x1xf32>
    %509 = vector.extract_strided_slice %450 {offsets = [9, 0], sizes = [1, 128], strides = [1, 1]} : vector<16x128xf32> to vector<1x128xf32>
    %510 = vector.broadcast %508 : vector<8x1xf32> to vector<8x128xf32>
    %511 = vector.broadcast %509 : vector<1x128xf32> to vector<8x128xf32>
    %512 = arith.mulf %510, %511 : vector<8x128xf32>
    %513 = arith.addf %507, %512 : vector<8x128xf32>
    %c7_53 = arith.constant 7 : index
    %c0_54 = arith.constant 0 : index
    %c0_55 = arith.constant 0 : index
    %514 = vector.load %arg2[%c7_53, %c0_54, %c0_55] : memref<17x8x128xf32, #tpu.memory_space<vmem>>, vector<1x8x128xf32>
    %515 = vector.shape_cast %514 : vector<1x8x128xf32> to vector<8x128xf32>
    %516 = vector.shape_cast %513 : vector<8x128xf32> to vector<1x8x128xf32>
    tpu.vector_store %arg2[%c7_53, %c0_54, %c0_55], %516 {strides = array<i32>} : memref<17x8x128xf32, #tpu.memory_space<vmem>>, vector<1x8x128xf32>,
    %517 = math.tanh %513 : vector<8x128xf32>
    %c15 = arith.constant 15 : index
    %c0_56 = arith.constant 0 : index
    %c0_57 = arith.constant 0 : index
    %518 = vector.load %arg2[%c15, %c0_56, %c0_57] : memref<17x8x128xf32, #tpu.memory_space<vmem>>, vector<1x8x128xf32>
    %519 = vector.shape_cast %518 : vector<1x8x128xf32> to vector<8x128xf32>
    %520 = vector.shape_cast %517 : vector<8x128xf32> to vector<1x8x128xf32>
    tpu.vector_store %arg2[%c15, %c0_56, %c0_57], %520 {strides = array<i32>} : memref<17x8x128xf32, #tpu.memory_space<vmem>>, vector<1x8x128xf32>,
    %c8_58 = arith.constant 8 : index
    %c0_59 = arith.constant 0 : index
    %c0_60 = arith.constant 0 : index
    %521 = vector.load %arg1[%c8_58, %c0_59, %c0_60] : memref<9x16x128xf32, #tpu.memory_space<vmem>>, vector<1x16x128xf32>
    %522 = vector.shape_cast %521 : vector<1x16x128xf32> to vector<16x128xf32>
    %523 = vector.extract_strided_slice %522 {offsets = [10, 0], sizes = [1, 128], strides = [1, 1]} : vector<16x128xf32> to vector<1x128xf32>
    %524 = vector.shape_cast %523 : vector<1x128xf32> to vector<1x128xf32>
    %525 = vector.broadcast %524 : vector<1x128xf32> to vector<8x128xf32>
    %526 = vector.extract_strided_slice %517 {offsets = [0, 0], sizes = [8, 1], strides = [1, 1]} : vector<8x128xf32> to vector<8x1xf32>
    %527 = vector.extract_strided_slice %522 {offsets = [0, 0], sizes = [1, 128], strides = [1, 1]} : vector<16x128xf32> to vector<1x128xf32>
    %528 = vector.broadcast %526 : vector<8x1xf32> to vector<8x128xf32>
    %529 = vector.broadcast %527 : vector<1x128xf32> to vector<8x128xf32>
    %530 = arith.mulf %528, %529 : vector<8x128xf32>
    %531 = arith.addf %525, %530 : vector<8x128xf32>
    %532 = vector.extract_strided_slice %517 {offsets = [0, 1], sizes = [8, 1], strides = [1, 1]} : vector<8x128xf32> to vector<8x1xf32>
    %533 = vector.extract_strided_slice %522 {offsets = [1, 0], sizes = [1, 128], strides = [1, 1]} : vector<16x128xf32> to vector<1x128xf32>
    %534 = vector.broadcast %532 : vector<8x1xf32> to vector<8x128xf32>
    %535 = vector.broadcast %533 : vector<1x128xf32> to vector<8x128xf32>
    %536 = arith.mulf %534, %535 : vector<8x128xf32>
    %537 = arith.addf %531, %536 : vector<8x128xf32>
    %538 = vector.extract_strided_slice %517 {offsets = [0, 2], sizes = [8, 1], strides = [1, 1]} : vector<8x128xf32> to vector<8x1xf32>
    %539 = vector.extract_strided_slice %522 {offsets = [2, 0], sizes = [1, 128], strides = [1, 1]} : vector<16x128xf32> to vector<1x128xf32>
    %540 = vector.broadcast %538 : vector<8x1xf32> to vector<8x128xf32>
    %541 = vector.broadcast %539 : vector<1x128xf32> to vector<8x128xf32>
    %542 = arith.mulf %540, %541 : vector<8x128xf32>
    %543 = arith.addf %537, %542 : vector<8x128xf32>
    %544 = vector.extract_strided_slice %517 {offsets = [0, 3], sizes = [8, 1], strides = [1, 1]} : vector<8x128xf32> to vector<8x1xf32>
    %545 = vector.extract_strided_slice %522 {offsets = [3, 0], sizes = [1, 128], strides = [1, 1]} : vector<16x128xf32> to vector<1x128xf32>
    %546 = vector.broadcast %544 : vector<8x1xf32> to vector<8x128xf32>
    %547 = vector.broadcast %545 : vector<1x128xf32> to vector<8x128xf32>
    %548 = arith.mulf %546, %547 : vector<8x128xf32>
    %549 = arith.addf %543, %548 : vector<8x128xf32>
    %550 = vector.extract_strided_slice %517 {offsets = [0, 4], sizes = [8, 1], strides = [1, 1]} : vector<8x128xf32> to vector<8x1xf32>
    %551 = vector.extract_strided_slice %522 {offsets = [4, 0], sizes = [1, 128], strides = [1, 1]} : vector<16x128xf32> to vector<1x128xf32>
    %552 = vector.broadcast %550 : vector<8x1xf32> to vector<8x128xf32>
    %553 = vector.broadcast %551 : vector<1x128xf32> to vector<8x128xf32>
    %554 = arith.mulf %552, %553 : vector<8x128xf32>
    %555 = arith.addf %549, %554 : vector<8x128xf32>
    %556 = vector.extract_strided_slice %517 {offsets = [0, 5], sizes = [8, 1], strides = [1, 1]} : vector<8x128xf32> to vector<8x1xf32>
    %557 = vector.extract_strided_slice %522 {offsets = [5, 0], sizes = [1, 128], strides = [1, 1]} : vector<16x128xf32> to vector<1x128xf32>
    %558 = vector.broadcast %556 : vector<8x1xf32> to vector<8x128xf32>
    %559 = vector.broadcast %557 : vector<1x128xf32> to vector<8x128xf32>
    %560 = arith.mulf %558, %559 : vector<8x128xf32>
    %561 = arith.addf %555, %560 : vector<8x128xf32>
    %562 = vector.extract_strided_slice %517 {offsets = [0, 6], sizes = [8, 1], strides = [1, 1]} : vector<8x128xf32> to vector<8x1xf32>
    %563 = vector.extract_strided_slice %522 {offsets = [6, 0], sizes = [1, 128], strides = [1, 1]} : vector<16x128xf32> to vector<1x128xf32>
    %564 = vector.broadcast %562 : vector<8x1xf32> to vector<8x128xf32>
    %565 = vector.broadcast %563 : vector<1x128xf32> to vector<8x128xf32>
    %566 = arith.mulf %564, %565 : vector<8x128xf32>
    %567 = arith.addf %561, %566 : vector<8x128xf32>
    %568 = vector.extract_strided_slice %517 {offsets = [0, 7], sizes = [8, 1], strides = [1, 1]} : vector<8x128xf32> to vector<8x1xf32>
    %569 = vector.extract_strided_slice %522 {offsets = [7, 0], sizes = [1, 128], strides = [1, 1]} : vector<16x128xf32> to vector<1x128xf32>
    %570 = vector.broadcast %568 : vector<8x1xf32> to vector<8x128xf32>
    %571 = vector.broadcast %569 : vector<1x128xf32> to vector<8x128xf32>
    %572 = arith.mulf %570, %571 : vector<8x128xf32>
    %573 = arith.addf %567, %572 : vector<8x128xf32>
    %574 = vector.extract_strided_slice %517 {offsets = [0, 8], sizes = [8, 1], strides = [1, 1]} : vector<8x128xf32> to vector<8x1xf32>
    %575 = vector.extract_strided_slice %522 {offsets = [8, 0], sizes = [1, 128], strides = [1, 1]} : vector<16x128xf32> to vector<1x128xf32>
    %576 = vector.broadcast %574 : vector<8x1xf32> to vector<8x128xf32>
    %577 = vector.broadcast %575 : vector<1x128xf32> to vector<8x128xf32>
    %578 = arith.mulf %576, %577 : vector<8x128xf32>
    %579 = arith.addf %573, %578 : vector<8x128xf32>
    %580 = vector.extract_strided_slice %517 {offsets = [0, 9], sizes = [8, 1], strides = [1, 1]} : vector<8x128xf32> to vector<8x1xf32>
    %581 = vector.extract_strided_slice %522 {offsets = [9, 0], sizes = [1, 128], strides = [1, 1]} : vector<16x128xf32> to vector<1x128xf32>
    %582 = vector.broadcast %580 : vector<8x1xf32> to vector<8x128xf32>
    %583 = vector.broadcast %581 : vector<1x128xf32> to vector<8x128xf32>
    %584 = arith.mulf %582, %583 : vector<8x128xf32>
    %585 = arith.addf %579, %584 : vector<8x128xf32>
    %c16 = arith.constant 16 : index
    %c0_61 = arith.constant 0 : index
    %c0_62 = arith.constant 0 : index
    %586 = vector.load %arg2[%c16, %c0_61, %c0_62] : memref<17x8x128xf32, #tpu.memory_space<vmem>>, vector<1x8x128xf32>
    %587 = vector.shape_cast %586 : vector<1x8x128xf32> to vector<8x128xf32>
    %588 = vector.shape_cast %585 : vector<8x128xf32> to vector<1x8x128xf32>
    tpu.vector_store %arg2[%c16, %c0_61, %c0_62], %588 {strides = array<i32>} : memref<17x8x128xf32, #tpu.memory_space<vmem>>, vector<1x8x128xf32>,
    return
  }
}

</mosaic_0001>

<llo_original>
// kernel: tpu_custom_call.1
$region0: #{tpu_custom_call.1}
  #allocation0 [shape = 'u32[]', space=smem, size = 0x4, offset = 0x4, fixed_abs, tag = 'smem constant byte address 0x4 - core index']
  #allocation1 [shape = 'u32[144,128]{1,0:T(1,128)}', space=vmem, size = 0x12000, scoped, tag = 'internal scratch']
  %s0 = inlined_call_operand.vmem [shape: f32[8,1], index: 0, kind: input, shape index: {}]
  %s1 = inlined_call_operand.hbm [shape: f32[9,16,128], index: 1, kind: input, shape index: {}]
  %s2 = inlined_call_operand.hbm [shape: f32[17,8,128], index: 2, kind: output, shape index: {}]
  %s3 = sld [smem:[#allocation0]]
  $region22: #{tpu_custom_call.1} parent=0
    _
  %s5 = ssub.s32 1, %s3
  %s6 = scalar_select 0, %s5, %s3
  $region1: #{tpu_custom_call.1} parent=0
    #allocation2 [shape = 'u8[73728]{0}', space=vmem, size = 0x12000, scoped, tag = 'input window, operand 1, single buffered']
    #allocation3 [shape = 's32[1]{0}', space=sflag, size = 0x4, scoped, tag = 'scoped memory for tpu_custom_call.1']
    #allocation4 [shape = 's32[1]{0}', space=sflag, size = 0x4, scoped, tag = 'scoped memory for tpu_custom_call.1']
    #allocation5 [shape = 'u8[69632]{0}', space=vmem, size = 0x11000, scoped, tag = 'output window, operand 0, single buffered']
    %7 = vsyncpa [#allocation3], 0
    %8 = vsyncpa [#allocation4], 0
    // Predicated region
    $region2: #{tpu_custom_call.1} parent=1 // pred_check
      _
    $region3: #{tpu_custom_call.1} parent=1 // pred_check_branch
      %10 = sbr.rel (0) target = $region5
    $region4: #{tpu_custom_call.1} parent=1 // pred_region
      _
    $region5: #{tpu_custom_call.1} parent=1 // pred_fallthru
      _
    // Predicated region
    $region6: #{tpu_custom_call.1} parent=1 // pred_check
      _
    $region7: #{tpu_custom_call.1} parent=1 // pred_check_branch
      %12 = sbr.rel (0) target = $region9
    $region8: #{tpu_custom_call.1} parent=1 // pred_region
      %s14 = ssub.s32 2304, 2304
      %15 = vsyncadd [#allocation3], %s14
      %s16 = sshll.u32 [#allocation2], 4
      %s17 = int_to_ptr.vmem [resolvable:$true] %s16
      %22 = dma.hbm_to_vmem [thread:$0]  %s1, 2304, %s17, [#allocation3], 128, 128, 8
    $region9: #{tpu_custom_call.1} parent=1 // pred_fallthru
      _
    // Predicated region
    $region10: #{tpu_custom_call.1} parent=1 // pred_check
      _
    $region11: #{tpu_custom_call.1} parent=1 // pred_check_branch
      %24 = sbr.rel (0) target = $region13
    $region12: #{tpu_custom_call.1} parent=1 // pred_region
      %25 = dma.done [#allocation3], 2304
    $region13: #{tpu_custom_call.1} parent=1 // pred_fallthru
      _
    %v26 = vld [vmem:[%s0] sm:$0xff]
    %v27 = vld [vmem:[#allocation2] sm:$0xff]
    %v28 = vld [vmem:[#allocation2 + $0x8] sm:$0xff]
    %30 = vset.pattern.permute.xlu0 0
    %31 = vperm.xlu0 %30, %v26
    %v32 = vpop.permute.xlu0 %31
    %v34 = vlaneseq
    %v35 = vshrl.u32 %v34, 7
    %v36 = vsub.s32 0, %v35
    %v37 = vrot.slane %v27, %v36
    %v38 = vmul.f32 %v32, %v37
    %v39 = vlaneseq
    %v40 = vshrl.u32 %v39, 7
    %v41 = vsub.s32 2, %v40
    %v42 = vrot.slane %v28, %v41
    %v43 = vadd.f32 %v42, %v38
    %44 = vst [vmem:[#allocation5] sm:$0xff] %v43
    %v45 = vtanh.pop %v43
    %s46 = scalar_lea.vmem [#allocation5], 64
    %47 = vst [vmem:[%s46] sm:$0xff] %v45
    %s48 = scalar_lea.vmem [#allocation2], 16
    %v49 = vld [vmem:[%s48] sm:$0xff]
    %v50 = vld [vmem:[%s48 + $0x8] sm:$0xff]
    %v51 = vlaneseq
    %v52 = vshrl.u32 %v51, 7
    %v53 = vsub.s32 2, %v52
    %v54 = vrot.slane %v50, %v53
    %56 = vset.pattern.permute.xlu0 0
    %57 = vperm.xlu0 %56, %v45
    %v58 = vpop.permute.xlu0 %57
    %v60 = vlaneseq
    %v61 = vshrl.u32 %v60, 7
    %v62 = vsub.s32 0, %v61
    %v63 = vrot.slane %v49, %v62
    %v64 = vmul.f32 %v58, %v63
    %v65 = vadd.f32 %v54, %v64
    %66 = vset.pattern.permute.xlu0 1
    %67 = vperm.xlu0 %66, %v45
    %v68 = vpop.permute.xlu0 %67
    %v70 = vlaneseq
    %v71 = vshrl.u32 %v70, 7
    %v72 = vsub.s32 1, %v71
    %v73 = vrot.slane %v49, %v72
    %v74 = vmul.f32 %v68, %v73
    %v75 = vadd.f32 %v65, %v74
    %76 = vset.pattern.permute.xlu0 2
    %77 = vperm.xlu0 %76, %v45
    %v78 = vpop.permute.xlu0 %77
    %v80 = vlaneseq
    %v81 = vshrl.u32 %v80, 7
    %v82 = vsub.s32 2, %v81
    %v83 = vrot.slane %v49, %v82
    %v84 = vmul.f32 %v78, %v83
    %v85 = vadd.f32 %v75, %v84
    %86 = vset.pattern.permute.xlu0 3
    %87 = vperm.xlu0 %86, %v45
    %v88 = vpop.permute.xlu0 %87
    %v90 = vlaneseq
    %v91 = vshrl.u32 %v90, 7
    %v92 = vsub.s32 3, %v91
    %v93 = vrot.slane %v49, %v92
    %v94 = vmul.f32 %v88, %v93
    %v95 = vadd.f32 %v85, %v94
    %96 = vset.pattern.permute.xlu0 4
    %97 = vperm.xlu0 %96, %v45
    %v98 = vpop.permute.xlu0 %97
    %v100 = vlaneseq
    %v101 = vshrl.u32 %v100, 7
    %v102 = vsub.s32 4, %v101
    %v103 = vrot.slane %v49, %v102
    %v104 = vmul.f32 %v98, %v103
    %v105 = vadd.f32 %v95, %v104
    %106 = vset.pattern.permute.xlu0 5
    %107 = vperm.xlu0 %106, %v45
    %v108 = vpop.permute.xlu0 %107
    %v110 = vlaneseq
    %v111 = vshrl.u32 %v110, 7
    %v112 = vsub.s32 5, %v111
    %v113 = vrot.slane %v49, %v112
    %v114 = vmul.f32 %v108, %v113
    %v115 = vadd.f32 %v105, %v114
    %116 = vset.pattern.permute.xlu0 6
    %117 = vperm.xlu0 %116, %v45
    %v118 = vpop.permute.xlu0 %117
    %v120 = vlaneseq
    %v121 = vshrl.u32 %v120, 7
    %v122 = vsub.s32 6, %v121
    %v123 = vrot.slane %v49, %v122
    %v124 = vmul.f32 %v118, %v123
    %v125 = vadd.f32 %v115, %v124
    %126 = vset.pattern.permute.xlu0 7
    %127 = vperm.xlu0 %126, %v45
    %v128 = vpop.permute.xlu0 %127
    %v130 = vlaneseq
    %v131 = vshrl.u32 %v130, 7
    %v132 = vsub.s32 7, %v131
    %v133 = vrot.slane %v49, %v132
    %v134 = vmul.f32 %v128, %v133
    %v135 = vadd.f32 %v125, %v134
    %136 = vset.pattern.permute.xlu0 8
    %137 = vperm.xlu0 %136, %v45
    %v138 = vpop.permute.xlu0 %137
    %v140 = vlaneseq
    %v141 = vshrl.u32 %v140, 7
    %v142 = vsub.s32 0, %v141
    %v143 = vrot.slane %v50, %v142
    %v144 = vmul.f32 %v138, %v143
    %v145 = vadd.f32 %v135, %v144
    %146 = vset.pattern.permute.xlu0 9
    %147 = vperm.xlu0 %146, %v45
    %v148 = vpop.permute.xlu0 %147
    %v150 = vlaneseq
    %v151 = vshrl.u32 %v150, 7
    %v152 = vsub.s32 1, %v151
    %v153 = vrot.slane %v50, %v152
    %v154 = vmul.f32 %v148, %v153
    %v155 = vadd.f32 %v145, %v154
    %s156 = scalar_lea.vmem [#allocation5], 8
    %157 = vst [vmem:[%s156] sm:$0xff] %v155
    %v158 = vtanh.pop %v155
    %s159 = scalar_lea.vmem [#allocation5], 72
    %160 = vst [vmem:[%s159] sm:$0xff] %v158
    %s161 = scalar_lea.vmem [#allocation2], 32
    %v162 = vld [vmem:[%s161] sm:$0xff]
    %v163 = vld [vmem:[%s161 + $0x8] sm:$0xff]
    %v164 = vlaneseq
    %v165 = vshrl.u32 %v164, 7
    %v166 = vsub.s32 2, %v165
    %v167 = vrot.slane %v163, %v166
    %169 = vset.pattern.permute.xlu0 0
    %170 = vperm.xlu0 %169, %v158
    %v171 = vpop.permute.xlu0 %170
    %v173 = vlaneseq
    %v174 = vshrl.u32 %v173, 7
    %v175 = vsub.s32 0, %v174
    %v176 = vrot.slane %v162, %v175
    %v177 = vmul.f32 %v171, %v176
    %v178 = vadd.f32 %v167, %v177
    %179 = vset.pattern.permute.xlu0 1
    %180 = vperm.xlu0 %179, %v158
    %v181 = vpop.permute.xlu0 %180
    %v183 = vlaneseq
    %v184 = vshrl.u32 %v183, 7
    %v185 = vsub.s32 1, %v184
    %v186 = vrot.slane %v162, %v185
    %v187 = vmul.f32 %v181, %v186
    %v188 = vadd.f32 %v178, %v187
    %189 = vset.pattern.permute.xlu0 2
    %190 = vperm.xlu0 %189, %v158
    %v191 = vpop.permute.xlu0 %190
    %v193 = vlaneseq
    %v194 = vshrl.u32 %v193, 7
    %v195 = vsub.s32 2, %v194
    %v196 = vrot.slane %v162, %v195
    %v197 = vmul.f32 %v191, %v196
    %v198 = vadd.f32 %v188, %v197
    %199 = vset.pattern.permute.xlu0 3
    %200 = vperm.xlu0 %199, %v158
    %v201 = vpop.permute.xlu0 %200
    %v203 = vlaneseq
    %v204 = vshrl.u32 %v203, 7
    %v205 = vsub.s32 3, %v204
    %v206 = vrot.slane %v162, %v205
    %v207 = vmul.f32 %v201, %v206
    %v208 = vadd.f32 %v198, %v207
    %209 = vset.pattern.permute.xlu0 4
    %210 = vperm.xlu0 %209, %v158
    %v211 = vpop.permute.xlu0 %210
    %v213 = vlaneseq
    %v214 = vshrl.u32 %v213, 7
    %v215 = vsub.s32 4, %v214
    %v216 = vrot.slane %v162, %v215
    %v217 = vmul.f32 %v211, %v216
    %v218 = vadd.f32 %v208, %v217
    %219 = vset.pattern.permute.xlu0 5
    %220 = vperm.xlu0 %219, %v158
    %v221 = vpop.permute.xlu0 %220
    %v223 = vlaneseq
    %v224 = vshrl.u32 %v223, 7
    %v225 = vsub.s32 5, %v224
    %v226 = vrot.slane %v162, %v225
    %v227 = vmul.f32 %v221, %v226
    %v228 = vadd.f32 %v218, %v227
    %229 = vset.pattern.permute.xlu0 6
    %230 = vperm.xlu0 %229, %v158
    %v231 = vpop.permute.xlu0 %230
    %v233 = vlaneseq
    %v234 = vshrl.u32 %v233, 7
    %v235 = vsub.s32 6, %v234
    %v236 = vrot.slane %v162, %v235
    %v237 = vmul.f32 %v231, %v236
    %v238 = vadd.f32 %v228, %v237
    %239 = vset.pattern.permute.xlu0 7
    %240 = vperm.xlu0 %239, %v158
    %v241 = vpop.permute.xlu0 %240
    %v243 = vlaneseq
    %v244 = vshrl.u32 %v243, 7
    %v245 = vsub.s32 7, %v244
    %v246 = vrot.slane %v162, %v245
    %v247 = vmul.f32 %v241, %v246
    %v248 = vadd.f32 %v238, %v247
    %249 = vset.pattern.permute.xlu0 8
    %250 = vperm.xlu0 %249, %v158
    %v251 = vpop.permute.xlu0 %250
    %v253 = vlaneseq
    %v254 = vshrl.u32 %v253, 7
    %v255 = vsub.s32 0, %v254
    %v256 = vrot.slane %v163, %v255
    %v257 = vmul.f32 %v251, %v256
    %v258 = vadd.f32 %v248, %v257
    %259 = vset.pattern.permute.xlu0 9
    %260 = vperm.xlu0 %259, %v158
    %v261 = vpop.permute.xlu0 %260
    %v263 = vlaneseq
    %v264 = vshrl.u32 %v263, 7
    %v265 = vsub.s32 1, %v264
    %v266 = vrot.slane %v163, %v265
    %v267 = vmul.f32 %v261, %v266
    %v268 = vadd.f32 %v258, %v267
    %s269 = scalar_lea.vmem [#allocation5], 16
    %270 = vst [vmem:[%s269] sm:$0xff] %v268
    %v271 = vtanh.pop %v268
    %s272 = scalar_lea.vmem [#allocation5], 80
    %273 = vst [vmem:[%s272] sm:$0xff] %v271
    %s274 = scalar_lea.vmem [#allocation2], 48
    %v275 = vld [vmem:[%s274] sm:$0xff]
    %v276 = vld [vmem:[%s274 + $0x8] sm:$0xff]
    %v277 = vlaneseq
    %v278 = vshrl.u32 %v277, 7
    %v279 = vsub.s32 2, %v278
    %v280 = vrot.slane %v276, %v279
    %282 = vset.pattern.permute.xlu0 0
    %283 = vperm.xlu0 %282, %v271
    %v284 = vpop.permute.xlu0 %283
    %v286 = vlaneseq
    %v287 = vshrl.u32 %v286, 7
    %v288 = vsub.s32 0, %v287
    %v289 = vrot.slane %v275, %v288
    %v290 = vmul.f32 %v284, %v289
    %v291 = vadd.f32 %v280, %v290
    %292 = vset.pattern.permute.xlu0 1
    %293 = vperm.xlu0 %292, %v271
    %v294 = vpop.permute.xlu0 %293
    %v296 = vlaneseq
    %v297 = vshrl.u32 %v296, 7
    %v298 = vsub.s32 1, %v297
    %v299 = vrot.slane %v275, %v298
    %v300 = vmul.f32 %v294, %v299
    %v301 = vadd.f32 %v291, %v300
    %302 = vset.pattern.permute.xlu0 2
    %303 = vperm.xlu0 %302, %v271
    %v304 = vpop.permute.xlu0 %303
    %v306 = vlaneseq
    %v307 = vshrl.u32 %v306, 7
    %v308 = vsub.s32 2, %v307
    %v309 = vrot.slane %v275, %v308
    %v310 = vmul.f32 %v304, %v309
    %v311 = vadd.f32 %v301, %v310
    %312 = vset.pattern.permute.xlu0 3
    %313 = vperm.xlu0 %312, %v271
    %v314 = vpop.permute.xlu0 %313
    %v316 = vlaneseq
    %v317 = vshrl.u32 %v316, 7
    %v318 = vsub.s32 3, %v317
    %v319 = vrot.slane %v275, %v318
    %v320 = vmul.f32 %v314, %v319
    %v321 = vadd.f32 %v311, %v320
    %322 = vset.pattern.permute.xlu0 4
    %323 = vperm.xlu0 %322, %v271
    %v324 = vpop.permute.xlu0 %323
    %v326 = vlaneseq
    %v327 = vshrl.u32 %v326, 7
    %v328 = vsub.s32 4, %v327
    %v329 = vrot.slane %v275, %v328
    %v330 = vmul.f32 %v324, %v329
    %v331 = vadd.f32 %v321, %v330
    %332 = vset.pattern.permute.xlu0 5
    %333 = vperm.xlu0 %332, %v271
    %v334 = vpop.permute.xlu0 %333
    %v336 = vlaneseq
    %v337 = vshrl.u32 %v336, 7
    %v338 = vsub.s32 5, %v337
    %v339 = vrot.slane %v275, %v338
    %v340 = vmul.f32 %v334, %v339
    %v341 = vadd.f32 %v331, %v340
    %342 = vset.pattern.permute.xlu0 6
    %343 = vperm.xlu0 %342, %v271
    %v344 = vpop.permute.xlu0 %343
    %v346 = vlaneseq
    %v347 = vshrl.u32 %v346, 7
    %v348 = vsub.s32 6, %v347
    %v349 = vrot.slane %v275, %v348
    %v350 = vmul.f32 %v344, %v349
    %v351 = vadd.f32 %v341, %v350
    %352 = vset.pattern.permute.xlu0 7
    %353 = vperm.xlu0 %352, %v271
    %v354 = vpop.permute.xlu0 %353
    %v356 = vlaneseq
    %v357 = vshrl.u32 %v356, 7
    %v358 = vsub.s32 7, %v357
    %v359 = vrot.slane %v275, %v358
    %v360 = vmul.f32 %v354, %v359
    %v361 = vadd.f32 %v351, %v360
    %362 = vset.pattern.permute.xlu0 8
    %363 = vperm.xlu0 %362, %v271
    %v364 = vpop.permute.xlu0 %363
    %v366 = vlaneseq
    %v367 = vshrl.u32 %v366, 7
    %v368 = vsub.s32 0, %v367
    %v369 = vrot.slane %v276, %v368
    %v370 = vmul.f32 %v364, %v369
    %v371 = vadd.f32 %v361, %v370
    %372 = vset.pattern.permute.xlu0 9
    %373 = vperm.xlu0 %372, %v271
    %v374 = vpop.permute.xlu0 %373
    %v376 = vlaneseq
    %v377 = vshrl.u32 %v376, 7
    %v378 = vsub.s32 1, %v377
    %v379 = vrot.slane %v276, %v378
    %v380 = vmul.f32 %v374, %v379
    %v381 = vadd.f32 %v371, %v380
    %s382 = scalar_lea.vmem [#allocation5], 24
    %383 = vst [vmem:[%s382] sm:$0xff] %v381
    %v384 = vtanh.pop %v381
    %s385 = scalar_lea.vmem [#allocation5], 88
    %386 = vst [vmem:[%s385] sm:$0xff] %v384
    %s387 = scalar_lea.vmem [#allocation2], 64
    %v388 = vld [vmem:[%s387] sm:$0xff]
    %v389 = vld [vmem:[%s387 + $0x8] sm:$0xff]
    %v390 = vlaneseq
    %v391 = vshrl.u32 %v390, 7
    %v392 = vsub.s32 2, %v391
    %v393 = vrot.slane %v389, %v392
    %395 = vset.pattern.permute.xlu0 0
    %396 = vperm.xlu0 %395, %v384
    %v397 = vpop.permute.xlu0 %396
    %v399 = vlaneseq
    %v400 = vshrl.u32 %v399, 7
    %v401 = vsub.s32 0, %v400
    %v402 = vrot.slane %v388, %v401
    %v403 = vmul.f32 %v397, %v402
    %v404 = vadd.f32 %v393, %v403
    %405 = vset.pattern.permute.xlu0 1
    %406 = vperm.xlu0 %405, %v384
    %v407 = vpop.permute.xlu0 %406
    %v409 = vlaneseq
    %v410 = vshrl.u32 %v409, 7
    %v411 = vsub.s32 1, %v410
    %v412 = vrot.slane %v388, %v411
    %v413 = vmul.f32 %v407, %v412
    %v414 = vadd.f32 %v404, %v413
    %415 = vset.pattern.permute.xlu0 2
    %416 = vperm.xlu0 %415, %v384
    %v417 = vpop.permute.xlu0 %416
    %v419 = vlaneseq
    %v420 = vshrl.u32 %v419, 7
    %v421 = vsub.s32 2, %v420
    %v422 = vrot.slane %v388, %v421
    %v423 = vmul.f32 %v417, %v422
    %v424 = vadd.f32 %v414, %v423
    %425 = vset.pattern.permute.xlu0 3
    %426 = vperm.xlu0 %425, %v384
    %v427 = vpop.permute.xlu0 %426
    %v429 = vlaneseq
    %v430 = vshrl.u32 %v429, 7
    %v431 = vsub.s32 3, %v430
    %v432 = vrot.slane %v388, %v431
    %v433 = vmul.f32 %v427, %v432
    %v434 = vadd.f32 %v424, %v433
    %435 = vset.pattern.permute.xlu0 4
    %436 = vperm.xlu0 %435, %v384
    %v437 = vpop.permute.xlu0 %436
    %v439 = vlaneseq
    %v440 = vshrl.u32 %v439, 7
    %v441 = vsub.s32 4, %v440
    %v442 = vrot.slane %v388, %v441
    %v443 = vmul.f32 %v437, %v442
    %v444 = vadd.f32 %v434, %v443
    %445 = vset.pattern.permute.xlu0 5
    %446 = vperm.xlu0 %445, %v384
    %v447 = vpop.permute.xlu0 %446
    %v449 = vlaneseq
    %v450 = vshrl.u32 %v449, 7
    %v451 = vsub.s32 5, %v450
    %v452 = vrot.slane %v388, %v451
    %v453 = vmul.f32 %v447, %v452
    %v454 = vadd.f32 %v444, %v453
    %455 = vset.pattern.permute.xlu0 6
    %456 = vperm.xlu0 %455, %v384
    %v457 = vpop.permute.xlu0 %456
    %v459 = vlaneseq
    %v460 = vshrl.u32 %v459, 7
    %v461 = vsub.s32 6, %v460
    %v462 = vrot.slane %v388, %v461
    %v463 = vmul.f32 %v457, %v462
    %v464 = vadd.f32 %v454, %v463
    %465 = vset.pattern.permute.xlu0 7
    %466 = vperm.xlu0 %465, %v384
    %v467 = vpop.permute.xlu0 %466
    %v469 = vlaneseq
    %v470 = vshrl.u32 %v469, 7
    %v471 = vsub.s32 7, %v470
    %v472 = vrot.slane %v388, %v471
    %v473 = vmul.f32 %v467, %v472
    %v474 = vadd.f32 %v464, %v473
    %475 = vset.pattern.permute.xlu0 8
    %476 = vperm.xlu0 %475, %v384
    %v477 = vpop.permute.xlu0 %476
    %v479 = vlaneseq
    %v480 = vshrl.u32 %v479, 7
    %v481 = vsub.s32 0, %v480
    %v482 = vrot.slane %v389, %v481
    %v483 = vmul.f32 %v477, %v482
    %v484 = vadd.f32 %v474, %v483
    %485 = vset.pattern.permute.xlu0 9
    %486 = vperm.xlu0 %485, %v384
    %v487 = vpop.permute.xlu0 %486
    %v489 = vlaneseq
    %v490 = vshrl.u32 %v489, 7
    %v491 = vsub.s32 1, %v490
    %v492 = vrot.slane %v389, %v491
    %v493 = vmul.f32 %v487, %v492
    %v494 = vadd.f32 %v484, %v493
    %s495 = scalar_lea.vmem [#allocation5], 32
    %496 = vst [vmem:[%s495] sm:$0xff] %v494
    %v497 = vtanh.pop %v494
    %s498 = scalar_lea.vmem [#allocation5], 96
    %499 = vst [vmem:[%s498] sm:$0xff] %v497
    %s500 = scalar_lea.vmem [#allocation2], 80
    %v501 = vld [vmem:[%s500] sm:$0xff]
    %v502 = vld [vmem:[%s500 + $0x8] sm:$0xff]
    %v503 = vlaneseq
    %v504 = vshrl.u32 %v503, 7
    %v505 = vsub.s32 2, %v504
    %v506 = vrot.slane %v502, %v505
    %508 = vset.pattern.permute.xlu0 0
    %509 = vperm.xlu0 %508, %v497
    %v510 = vpop.permute.xlu0 %509
    %v512 = vlaneseq
    %v513 = vshrl.u32 %v512, 7
    %v514 = vsub.s32 0, %v513
    %v515 = vrot.slane %v501, %v514
    %v516 = vmul.f32 %v510, %v515
    %v517 = vadd.f32 %v506, %v516
    %518 = vset.pattern.permute.xlu0 1
    %519 = vperm.xlu0 %518, %v497
    %v520 = vpop.permute.xlu0 %519
    %v522 = vlaneseq
    %v523 = vshrl.u32 %v522, 7
    %v524 = vsub.s32 1, %v523
    %v525 = vrot.slane %v501, %v524
    %v526 = vmul.f32 %v520, %v525
    %v527 = vadd.f32 %v517, %v526
    %528 = vset.pattern.permute.xlu0 2
    %529 = vperm.xlu0 %528, %v497
    %v530 = vpop.permute.xlu0 %529
    %v532 = vlaneseq
    %v533 = vshrl.u32 %v532, 7
    %v534 = vsub.s32 2, %v533
    %v535 = vrot.slane %v501, %v534
    %v536 = vmul.f32 %v530, %v535
    %v537 = vadd.f32 %v527, %v536
    %538 = vset.pattern.permute.xlu0 3
    %539 = vperm.xlu0 %538, %v497
    %v540 = vpop.permute.xlu0 %539
    %v542 = vlaneseq
    %v543 = vshrl.u32 %v542, 7
    %v544 = vsub.s32 3, %v543
    %v545 = vrot.slane %v501, %v544
    %v546 = vmul.f32 %v540, %v545
    %v547 = vadd.f32 %v537, %v546
    %548 = vset.pattern.permute.xlu0 4
    %549 = vperm.xlu0 %548, %v497
    %v550 = vpop.permute.xlu0 %549
    %v552 = vlaneseq
    %v553 = vshrl.u32 %v552, 7
    %v554 = vsub.s32 4, %v553
    %v555 = vrot.slane %v501, %v554
    %v556 = vmul.f32 %v550, %v555
    %v557 = vadd.f32 %v547, %v556
    %558 = vset.pattern.permute.xlu0 5
    %559 = vperm.xlu0 %558, %v497
    %v560 = vpop.permute.xlu0 %559
    %v562 = vlaneseq
    %v563 = vshrl.u32 %v562, 7
    %v564 = vsub.s32 5, %v563
    %v565 = vrot.slane %v501, %v564
    %v566 = vmul.f32 %v560, %v565
    %v567 = vadd.f32 %v557, %v566
    %568 = vset.pattern.permute.xlu0 6
    %569 = vperm.xlu0 %568, %v497
    %v570 = vpop.permute.xlu0 %569
    %v572 = vlaneseq
    %v573 = vshrl.u32 %v572, 7
    %v574 = vsub.s32 6, %v573
    %v575 = vrot.slane %v501, %v574
    %v576 = vmul.f32 %v570, %v575
    %v577 = vadd.f32 %v567, %v576
    %578 = vset.pattern.permute.xlu0 7
    %579 = vperm.xlu0 %578, %v497
    %v580 = vpop.permute.xlu0 %579
    %v582 = vlaneseq
    %v583 = vshrl.u32 %v582, 7
    %v584 = vsub.s32 7, %v583
    %v585 = vrot.slane %v501, %v584
    %v586 = vmul.f32 %v580, %v585
    %v587 = vadd.f32 %v577, %v586
    %588 = vset.pattern.permute.xlu0 8
    %589 = vperm.xlu0 %588, %v497
    %v590 = vpop.permute.xlu0 %589
    %v592 = vlaneseq
    %v593 = vshrl.u32 %v592, 7
    %v594 = vsub.s32 0, %v593
    %v595 = vrot.slane %v502, %v594
    %v596 = vmul.f32 %v590, %v595
    %v597 = vadd.f32 %v587, %v596
    %598 = vset.pattern.permute.xlu0 9
    %599 = vperm.xlu0 %598, %v497
    %v600 = vpop.permute.xlu0 %599
    %v602 = vlaneseq
    %v603 = vshrl.u32 %v602, 7
    %v604 = vsub.s32 1, %v603
    %v605 = vrot.slane %v502, %v604
    %v606 = vmul.f32 %v600, %v605
    %v607 = vadd.f32 %v597, %v606
    %s608 = scalar_lea.vmem [#allocation5], 40
    %609 = vst [vmem:[%s608] sm:$0xff] %v607
    %v610 = vtanh.pop %v607
    %s611 = scalar_lea.vmem [#allocation5], 104
    %612 = vst [vmem:[%s611] sm:$0xff] %v610
    %s613 = scalar_lea.vmem [#allocation2], 96
    %v614 = vld [vmem:[%s613] sm:$0xff]
    %v615 = vld [vmem:[%s613 + $0x8] sm:$0xff]
    %v616 = vlaneseq
    %v617 = vshrl.u32 %v616, 7
    %v618 = vsub.s32 2, %v617
    %v619 = vrot.slane %v615, %v618
    %621 = vset.pattern.permute.xlu0 0
    %622 = vperm.xlu0 %621, %v610
    %v623 = vpop.permute.xlu0 %622
    %v625 = vlaneseq
    %v626 = vshrl.u32 %v625, 7
    %v627 = vsub.s32 0, %v626
    %v628 = vrot.slane %v614, %v627
    %v629 = vmul.f32 %v623, %v628
    %v630 = vadd.f32 %v619, %v629
    %631 = vset.pattern.permute.xlu0 1
    %632 = vperm.xlu0 %631, %v610
    %v633 = vpop.permute.xlu0 %632
    %v635 = vlaneseq
    %v636 = vshrl.u32 %v635, 7
    %v637 = vsub.s32 1, %v636
    %v638 = vrot.slane %v614, %v637
    %v639 = vmul.f32 %v633, %v638
    %v640 = vadd.f32 %v630, %v639
    %641 = vset.pattern.permute.xlu0 2
    %642 = vperm.xlu0 %641, %v610
    %v643 = vpop.permute.xlu0 %642
    %v645 = vlaneseq
    %v646 = vshrl.u32 %v645, 7
    %v647 = vsub.s32 2, %v646
    %v648 = vrot.slane %v614, %v647
    %v649 = vmul.f32 %v643, %v648
    %v650 = vadd.f32 %v640, %v649
    %651 = vset.pattern.permute.xlu0 3
    %652 = vperm.xlu0 %651, %v610
    %v653 = vpop.permute.xlu0 %652
    %v655 = vlaneseq
    %v656 = vshrl.u32 %v655, 7
    %v657 = vsub.s32 3, %v656
    %v658 = vrot.slane %v614, %v657
    %v659 = vmul.f32 %v653, %v658
    %v660 = vadd.f32 %v650, %v659
    %661 = vset.pattern.permute.xlu0 4
    %662 = vperm.xlu0 %661, %v610
    %v663 = vpop.permute.xlu0 %662
    %v665 = vlaneseq
    %v666 = vshrl.u32 %v665, 7
    %v667 = vsub.s32 4, %v666
    %v668 = vrot.slane %v614, %v667
    %v669 = vmul.f32 %v663, %v668
    %v670 = vadd.f32 %v660, %v669
    %671 = vset.pattern.permute.xlu0 5
    %672 = vperm.xlu0 %671, %v610
    %v673 = vpop.permute.xlu0 %672
    %v675 = vlaneseq
    %v676 = vshrl.u32 %v675, 7
    %v677 = vsub.s32 5, %v676
    %v678 = vrot.slane %v614, %v677
    %v679 = vmul.f32 %v673, %v678
    %v680 = vadd.f32 %v670, %v679
    %681 = vset.pattern.permute.xlu0 6
    %682 = vperm.xlu0 %681, %v610
    %v683 = vpop.permute.xlu0 %682
    %v685 = vlaneseq
    %v686 = vshrl.u32 %v685, 7
    %v687 = vsub.s32 6, %v686
    %v688 = vrot.slane %v614, %v687
    %v689 = vmul.f32 %v683, %v688
    %v690 = vadd.f32 %v680, %v689
    %691 = vset.pattern.permute.xlu0 7
    %692 = vperm.xlu0 %691, %v610
    %v693 = vpop.permute.xlu0 %692
    %v695 = vlaneseq
    %v696 = vshrl.u32 %v695, 7
    %v697 = vsub.s32 7, %v696
    %v698 = vrot.slane %v614, %v697
    %v699 = vmul.f32 %v693, %v698
    %v700 = vadd.f32 %v690, %v699
    %701 = vset.pattern.permute.xlu0 8
    %702 = vperm.xlu0 %701, %v610
    %v703 = vpop.permute.xlu0 %702
    %v705 = vlaneseq
    %v706 = vshrl.u32 %v705, 7
    %v707 = vsub.s32 0, %v706
    %v708 = vrot.slane %v615, %v707
    %v709 = vmul.f32 %v703, %v708
    %v710 = vadd.f32 %v700, %v709
    %711 = vset.pattern.permute.xlu0 9
    %712 = vperm.xlu0 %711, %v610
    %v713 = vpop.permute.xlu0 %712
    %v715 = vlaneseq
    %v716 = vshrl.u32 %v715, 7
    %v717 = vsub.s32 1, %v716
    %v718 = vrot.slane %v615, %v717
    %v719 = vmul.f32 %v713, %v718
    %v720 = vadd.f32 %v710, %v719
    %s721 = scalar_lea.vmem [#allocation5], 48
    %722 = vst [vmem:[%s721] sm:$0xff] %v720
    %v723 = vtanh.pop %v720
    %s724 = scalar_lea.vmem [#allocation5], 112
    %725 = vst [vmem:[%s724] sm:$0xff] %v723
    %s726 = scalar_lea.vmem [#allocation2], 112
    %v727 = vld [vmem:[%s726] sm:$0xff]
    %v728 = vld [vmem:[%s726 + $0x8] sm:$0xff]
    %v729 = vlaneseq
    %v730 = vshrl.u32 %v729, 7
    %v731 = vsub.s32 2, %v730
    %v732 = vrot.slane %v728, %v731
    %734 = vset.pattern.permute.xlu0 0
    %735 = vperm.xlu0 %734, %v723
    %v736 = vpop.permute.xlu0 %735
    %v738 = vlaneseq
    %v739 = vshrl.u32 %v738, 7
    %v740 = vsub.s32 0, %v739
    %v741 = vrot.slane %v727, %v740
    %v742 = vmul.f32 %v736, %v741
    %v743 = vadd.f32 %v732, %v742
    %744 = vset.pattern.permute.xlu0 1
    %745 = vperm.xlu0 %744, %v723
    %v746 = vpop.permute.xlu0 %745
    %v748 = vlaneseq
    %v749 = vshrl.u32 %v748, 7
    %v750 = vsub.s32 1, %v749
    %v751 = vrot.slane %v727, %v750
    %v752 = vmul.f32 %v746, %v751
    %v753 = vadd.f32 %v743, %v752
    %754 = vset.pattern.permute.xlu0 2
    %755 = vperm.xlu0 %754, %v723
    %v756 = vpop.permute.xlu0 %755
    %v758 = vlaneseq
    %v759 = vshrl.u32 %v758, 7
    %v760 = vsub.s32 2, %v759
    %v761 = vrot.slane %v727, %v760
    %v762 = vmul.f32 %v756, %v761
    %v763 = vadd.f32 %v753, %v762
    %764 = vset.pattern.permute.xlu0 3
    %765 = vperm.xlu0 %764, %v723
    %v766 = vpop.permute.xlu0 %765
    %v768 = vlaneseq
    %v769 = vshrl.u32 %v768, 7
    %v770 = vsub.s32 3, %v769
    %v771 = vrot.slane %v727, %v770
    %v772 = vmul.f32 %v766, %v771
    %v773 = vadd.f32 %v763, %v772
    %774 = vset.pattern.permute.xlu0 4
    %775 = vperm.xlu0 %774, %v723
    %v776 = vpop.permute.xlu0 %775
    %v778 = vlaneseq
    %v779 = vshrl.u32 %v778, 7
    %v780 = vsub.s32 4, %v779
    %v781 = vrot.slane %v727, %v780
    %v782 = vmul.f32 %v776, %v781
    %v783 = vadd.f32 %v773, %v782
    %784 = vset.pattern.permute.xlu0 5
    %785 = vperm.xlu0 %784, %v723
    %v786 = vpop.permute.xlu0 %785
    %v788 = vlaneseq
    %v789 = vshrl.u32 %v788, 7
    %v790 = vsub.s32 5, %v789
    %v791 = vrot.slane %v727, %v790
    %v792 = vmul.f32 %v786, %v791
    %v793 = vadd.f32 %v783, %v792
    %794 = vset.pattern.permute.xlu0 6
    %795 = vperm.xlu0 %794, %v723
    %v796 = vpop.permute.xlu0 %795
    %v798 = vlaneseq
    %v799 = vshrl.u32 %v798, 7
    %v800 = vsub.s32 6, %v799
    %v801 = vrot.slane %v727, %v800
    %v802 = vmul.f32 %v796, %v801
    %v803 = vadd.f32 %v793, %v802
    %804 = vset.pattern.permute.xlu0 7
    %805 = vperm.xlu0 %804, %v723
    %v806 = vpop.permute.xlu0 %805
    %v808 = vlaneseq
    %v809 = vshrl.u32 %v808, 7
    %v810 = vsub.s32 7, %v809
    %v811 = vrot.slane %v727, %v810
    %v812 = vmul.f32 %v806, %v811
    %v813 = vadd.f32 %v803, %v812
    %814 = vset.pattern.permute.xlu0 8
    %815 = vperm.xlu0 %814, %v723
    %v816 = vpop.permute.xlu0 %815
    %v818 = vlaneseq
    %v819 = vshrl.u32 %v818, 7
    %v820 = vsub.s32 0, %v819
    %v821 = vrot.slane %v728, %v820
    %v822 = vmul.f32 %v816, %v821
    %v823 = vadd.f32 %v813, %v822
    %824 = vset.pattern.permute.xlu0 9
    %825 = vperm.xlu0 %824, %v723
    %v826 = vpop.permute.xlu0 %825
    %v828 = vlaneseq
    %v829 = vshrl.u32 %v828, 7
    %v830 = vsub.s32 1, %v829
    %v831 = vrot.slane %v728, %v830
    %v832 = vmul.f32 %v826, %v831
    %v833 = vadd.f32 %v823, %v832
    %s834 = scalar_lea.vmem [#allocation5], 56
    %835 = vst [vmem:[%s834] sm:$0xff] %v833
    %v836 = vtanh.pop %v833
    %s837 = scalar_lea.vmem [#allocation5], 120
    %838 = vst [vmem:[%s837] sm:$0xff] %v836
    %s839 = scalar_lea.vmem [#allocation2], 128
    %v840 = vld [vmem:[%s839] sm:$0xff]
    %v841 = vld [vmem:[%s839 + $0x8] sm:$0xff]
    %v842 = vlaneseq
    %v843 = vshrl.u32 %v842, 7
    %v844 = vsub.s32 2, %v843
    %v845 = vrot.slane %v841, %v844
    %847 = vset.pattern.permute.xlu0 0
    %848 = vperm.xlu0 %847, %v836
    %v849 = vpop.permute.xlu0 %848
    %v851 = vlaneseq
    %v852 = vshrl.u32 %v851, 7
    %v853 = vsub.s32 0, %v852
    %v854 = vrot.slane %v840, %v853
    %v855 = vmul.f32 %v849, %v854
    %v856 = vadd.f32 %v845, %v855
    %857 = vset.pattern.permute.xlu0 1
    %858 = vperm.xlu0 %857, %v836
    %v859 = vpop.permute.xlu0 %858
    %v861 = vlaneseq
    %v862 = vshrl.u32 %v861, 7
    %v863 = vsub.s32 1, %v862
    %v864 = vrot.slane %v840, %v863
    %v865 = vmul.f32 %v859, %v864
    %v866 = vadd.f32 %v856, %v865
    %867 = vset.pattern.permute.xlu0 2
    %868 = vperm.xlu0 %867, %v836
    %v869 = vpop.permute.xlu0 %868
    %v871 = vlaneseq
    %v872 = vshrl.u32 %v871, 7
    %v873 = vsub.s32 2, %v872
    %v874 = vrot.slane %v840, %v873
    %v875 = vmul.f32 %v869, %v874
    %v876 = vadd.f32 %v866, %v875
    %877 = vset.pattern.permute.xlu0 3
    %878 = vperm.xlu0 %877, %v836
    %v879 = vpop.permute.xlu0 %878
    %v881 = vlaneseq
    %v882 = vshrl.u32 %v881, 7
    %v883 = vsub.s32 3, %v882
    %v884 = vrot.slane %v840, %v883
    %v885 = vmul.f32 %v879, %v884
    %v886 = vadd.f32 %v876, %v885
    %887 = vset.pattern.permute.xlu0 4
    %888 = vperm.xlu0 %887, %v836
    %v889 = vpop.permute.xlu0 %888
    %v891 = vlaneseq
    %v892 = vshrl.u32 %v891, 7
    %v893 = vsub.s32 4, %v892
    %v894 = vrot.slane %v840, %v893
    %v895 = vmul.f32 %v889, %v894
    %v896 = vadd.f32 %v886, %v895
    %897 = vset.pattern.permute.xlu0 5
    %898 = vperm.xlu0 %897, %v836
    %v899 = vpop.permute.xlu0 %898
    %v901 = vlaneseq
    %v902 = vshrl.u32 %v901, 7
    %v903 = vsub.s32 5, %v902
    %v904 = vrot.slane %v840, %v903
    %v905 = vmul.f32 %v899, %v904
    %v906 = vadd.f32 %v896, %v905
    %907 = vset.pattern.permute.xlu0 6
    %908 = vperm.xlu0 %907, %v836
    %v909 = vpop.permute.xlu0 %908
    %v911 = vlaneseq
    %v912 = vshrl.u32 %v911, 7
    %v913 = vsub.s32 6, %v912
    %v914 = vrot.slane %v840, %v913
    %v915 = vmul.f32 %v909, %v914
    %v916 = vadd.f32 %v906, %v915
    %917 = vset.pattern.permute.xlu0 7
    %918 = vperm.xlu0 %917, %v836
    %v919 = vpop.permute.xlu0 %918
    %v921 = vlaneseq
    %v922 = vshrl.u32 %v921, 7
    %v923 = vsub.s32 7, %v922
    %v924 = vrot.slane %v840, %v923
    %v925 = vmul.f32 %v919, %v924
    %v926 = vadd.f32 %v916, %v925
    %927 = vset.pattern.permute.xlu0 8
    %928 = vperm.xlu0 %927, %v836
    %v929 = vpop.permute.xlu0 %928
    %v931 = vlaneseq
    %v932 = vshrl.u32 %v931, 7
    %v933 = vsub.s32 0, %v932
    %v934 = vrot.slane %v841, %v933
    %v935 = vmul.f32 %v929, %v934
    %v936 = vadd.f32 %v926, %v935
    %937 = vset.pattern.permute.xlu0 9
    %938 = vperm.xlu0 %937, %v836
    %v939 = vpop.permute.xlu0 %938
    %v941 = vlaneseq
    %v942 = vshrl.u32 %v941, 7
    %v943 = vsub.s32 1, %v942
    %v944 = vrot.slane %v841, %v943
    %v945 = vmul.f32 %v939, %v944
    %v946 = vadd.f32 %v936, %v945
    %s947 = scalar_lea.vmem [#allocation5], 128
    %948 = vst [vmem:[%s947] sm:$0xff] %v946
    // Predicated region
    $region14: #{tpu_custom_call.1} parent=1 // pred_check
      _
    $region15: #{tpu_custom_call.1} parent=1 // pred_check_branch
      %950 = sbr.rel (0) target = $region17
    $region16: #{tpu_custom_call.1} parent=1 // pred_region
      %s952 = ssub.s32 2176, 2176
      %953 = vsyncadd [#allocation4], %s952
      %s954 = sshll.u32 [#allocation5], 4
      %s955 = int_to_ptr.vmem [resolvable:$true] %s954
      %960 = dma.vmem_to_hbm [thread:$0]  %s955, 2176, %s2, [#allocation4], 128, 128, 8
    $region17: #{tpu_custom_call.1} parent=1 // pred_fallthru
      _
    // Predicated region
    $region18: #{tpu_custom_call.1} parent=1 // pred_check
      _
    $region19: #{tpu_custom_call.1} parent=1 // pred_check_branch
      %962 = sbr.rel (0) target = $region21
    $region20: #{tpu_custom_call.1} parent=1 // pred_region
      %963 = dma.done [#allocation4], 2176
    $region21: #{tpu_custom_call.1} parent=1 // pred_fallthru
      _
    %964 = vsyncpa [#allocation3], 1
    %965 = vsyncpa [#allocation4], 1

</llo_original>
